<compile_context>
chip_gen: v7x
topology: tpu7x:2x2x1
jax: 0.10.0
libtpu: 0.0.40
codegen_flags: <defaults>
</compile_context>

<pallas_src>
import functools
import math

import jax
import jax.numpy as jnp
from jax import lax
from jax.experimental import pallas as pl
from jax.experimental.pallas import tpu as pltpu


def _resblock_kernel(x_ref, w1_ref, b1_ref, w2_ref, b2_ref, out_ref,
                     xbuf_ref, midbuf_ref, *, W, HW, margin):
    # x_ref   : (NB, Cin, HW)   f32 input block (NB images)
    # w1_ref  : (9, Cmid, Cin)  bf16 conv1 weights, tap order t = ky*3 + kx
    # b1_ref  : (Cmid, 1)       f32 conv1 bias
    # w2_ref  : (9, Cout, Cmid) bf16 conv2 weights
    # b2_ref  : (Cout, 1)       f32 conv2 bias
    # out_ref : (NB, Cout, HW)  f32 output block (lane-dense, HW % 128 == 0)
    # xbuf_ref  : (Cin,  L) bf16 flat zero-haloed buffer, L = margin + NB*(HW+margin)
    # midbuf_ref: (Cmid, L) bf16 flat zero-haloed buffer for conv1 activation
    NB, Cin, _ = x_ref.shape
    Cmid = w1_ref.shape[1]
    stride = HW + margin                 # lane stride between image origins
    span = (NB - 1) * stride + HW        # lanes covered by the fused convs

    # ---- hoisted once per grid step: W-boundary masks (review item 2) ------
    # Column of each lane within its image; gap lanes only ever read zeros, so
    # their mask value is irrelevant.
    pos = lax.broadcasted_iota(jnp.int32, (1, span), 1)
    col = (pos % stride) % W
    not_left = col != 0                  # kx == 0 taps invalid at x == 0
    not_right = col != (W - 1)           # kx == 2 taps invalid at x == W - 1

    # ---- zero only the halo regions (review item 1, megacore-safe) ---------
    # Image regions are fully overwritten below, so only the leading margin
    # and the gap after each image need zeroing.  Not gated on program_id==0:
    # scratch is per-core under "parallel" sharding, so iteration 0 may never
    # run on a given core.
    xz = jnp.zeros((Cin, margin), xbuf_ref.dtype)
    mz = jnp.zeros((Cmid, margin), midbuf_ref.dtype)
    xbuf_ref[:, 0:margin] = xz
    midbuf_ref[:, 0:margin] = mz
    for n in range(NB):
        e = margin + n * stride + HW     # start of the gap after image n
        xbuf_ref[:, e:e + margin] = xz
        midbuf_ref[:, e:e + margin] = mz

    # ---- stage the NB input images (bf16) at 128-aligned lane offsets ------
    for n in range(NB):
        b0 = margin + n * stride
        xbuf_ref[:, b0:b0 + HW] = x_ref[n].astype(xbuf_ref.dtype)

    def conv3x3(buf_ref, w_ref):
        """3x3 SAME conv as nine shallow MXU dots over all NB images at once.

        Each tap is a static lane slice of the flat zero-haloed buffer; the
        halos provide the row (H) padding, the hoisted masks provide the
        column (W) padding (applied to the f32 product, not the bf16 patch).
        """
        co = w_ref.shape[1]
        acc = jnp.zeros((co, span), jnp.float32)
        for ky in range(3):
            for kx in range(3):
                d = (ky - 1) * W + (kx - 1)
                patch = buf_ref[:, margin + d:margin + d + span]   # (C, span)
                contrib = jnp.dot(w_ref[ky * 3 + kx], patch,
                                  preferred_element_type=jnp.float32)
                if kx == 0:
                    contrib = jnp.where(not_left, contrib, 0.0)
                elif kx == 2:
                    contrib = jnp.where(not_right, contrib, 0.0)
                acc = acc + contrib
        return acc

    # conv1 -> bias -> ReLU (f32); stage per image so the inter-image gaps of
    # midbuf stay zero even with a nonzero bias.
    a1 = jnp.maximum(conv3x3(xbuf_ref, w1_ref) + b1_ref[...], 0.0)
    for n in range(NB):
        b0 = margin + n * stride
        midbuf_ref[:, b0:b0 + HW] = (
            a1[:, n * stride:n * stride + HW].astype(midbuf_ref.dtype))

    # conv2 -> bias (f32), residual add, lane-dense unmasked stores.
    a2 = conv3x3(midbuf_ref, w2_ref) + b2_ref[...]
    for n in range(NB):
        out_ref[n] = (x_ref[n] + a2[:, n * stride:n * stride + HW]).astype(
            out_ref.dtype)


def _pack_weight_taps(w_hwio):
    """HWIO (3,3,Ci,Co) -> (9, Co, Ci) bf16, tap order t = ky*3 + kx."""
    kh, kw, ci, co = w_hwio.shape
    return jnp.transpose(w_hwio, (0, 1, 3, 2)).reshape(kh * kw, co, ci).astype(
        jnp.bfloat16)


def res_block_db(x_nchw, w1_hwio, b1, w2_hwio, b2, *, images_per_block=1):
    """Pallas implementation of _ResBLockDB.forward.  x_nchw: (N, C, H, W)."""
    N, Cin, H, W = x_nchw.shape
    assert w1_hwio.shape[:2] == (3, 3) and w2_hwio.shape[:2] == (3, 3)
    Cmid = w1_hwio.shape[3]
    Cout = w2_hwio.shape[3]
    assert w1_hwio.shape[2] == Cin and w2_hwio.shape[2] == Cmid
    assert Cin == Cout, "residual add requires inchannel == outchannel"
    HW = H * W
    # Lane-dense layout assumptions (review correctness concern: make explicit).
    assert HW % 128 == 0, "lane-dense layout requires H*W to be a multiple of 128"
    NB = images_per_block
    assert N % NB == 0, "images_per_block must divide the batch size"

    # NCHW -> (N, C, H*W): a free reshape (no transpose / pad HBM passes).
    x_flat = x_nchw.reshape(N, Cin, HW).astype(jnp.float32)

    w1_t = _pack_weight_taps(w1_hwio)            # (9, Cmid, Cin) bf16
    w2_t = _pack_weight_taps(w2_hwio)            # (9, Cout, Cmid) bf16
    b1_col = b1.reshape(Cmid, 1).astype(jnp.float32)
    b2_col = b2.reshape(Cout, 1).astype(jnp.float32)

    # Halo between / around images: >= W+1 zero lanes (row padding for the 3x3
    # taps) rounded to a multiple of 128 so every image region and every zero
    # store is lane-aligned.
    margin = ((W + 1 + 127) // 128) * 128
    assert margin >= W + 1
    buf_len = margin + NB * (HW + margin)

    kernel = functools.partial(_resblock_kernel, W=W, HW=HW, margin=margin)

    out_flat = pl.pallas_call(
        kernel,
        out_shape=jax.ShapeDtypeStruct((N, Cout, HW), jnp.float32),
        grid_spec=pltpu.PrefetchScalarGridSpec(
            num_scalar_prefetch=0,
            grid=(N // NB,),
            in_specs=[
                pl.BlockSpec((NB, Cin, HW), lambda n: (n, 0, 0)),
                # Constant-index weights/biases.  TODO(synk): single-buffer
                # these (pipeline_mode=pl.Buffered(1)) on v7x once the weight
                # footprint matters for the 64 MiB VMEM budget.
                pl.BlockSpec((9, Cmid, Cin), lambda n: (0, 0, 0)),
                pl.BlockSpec((Cmid, 1), lambda n: (0, 0)),
                pl.BlockSpec((9, Cout, Cmid), lambda n: (0, 0, 0)),
                pl.BlockSpec((Cout, 1), lambda n: (0, 0)),
            ],
            out_specs=pl.BlockSpec((NB, Cout, HW), lambda n: (n, 0, 0)),
            scratch_shapes=[
                pltpu.VMEM((Cin, buf_len), jnp.bfloat16),
                pltpu.VMEM((Cmid, buf_len), jnp.bfloat16),
            ],
        ),
        compiler_params=pltpu.CompilerParams(
            dimension_semantics=("parallel",)),
    )(x_flat, w1_t, b1_col, w2_t, b2_col)

    # (N, Cout, H*W) -> NCHW, again a free reshape.
    return out_flat.reshape(N, Cout, H, W)


def _reference(x_nchw, w1_hwio, b1, w2_hwio, b2):
    """Pure-JAX f32 reference matching the PyTorch forward (for validation)."""
    dn = ("NCHW", "HWIO", "NCHW")
    x = x_nchw.astype(jnp.float32)
    y = lax.conv_general_dilated(x, w1_hwio, (1, 1), "SAME", dimension_numbers=dn)
    y = jnp.maximum(y + b1.reshape(1, -1, 1, 1), 0.0)
    y = lax.conv_general_dilated(y, w2_hwio, (1, 1), "SAME", dimension_numbers=dn)
    y = y + b2.reshape(1, -1, 1, 1)
    return y + x  # residual


if __name__ == "__main__":
    key = jax.random.PRNGKey(0)
    k_x, k_w1, k_w2, k_b1, k_b2 = jax.random.split(key, 5)

    # Module config (small): inchannel = outchannel = 4, stride = 1
    N, Cin, H, W = 2, 4, 16, 16
    Cout = 4

    # Weight init matching the PyTorch module:
    #   weight ~ Normal(0, sqrt(2 / (kh * kw * out_channels)))
    std = math.sqrt(2.0 / (3 * 3 * Cout))
    w1 = std * jax.random.normal(k_w1, (3, 3, Cin, Cout), jnp.float32)   # HWIO
    w2 = std * jax.random.normal(k_w2, (3, 3, Cout, Cout), jnp.float32)  # HWIO
    # Nonzero biases so the bias-add path is actually validated
    # (review correctness concern; the module itself zero-inits them).
    b1 = 0.1 * jax.random.normal(k_b1, (Cout,), jnp.float32)
    b2 = 0.1 * jax.random.normal(k_b2, (Cout,), jnp.float32)

    x = jax.random.normal(k_x, (N, Cin, H, W), jnp.float32)  # NCHW

    ref = _reference(x, w1, b1, w2, b2)

    # One image per grid step: two "parallel" steps -> both v7x TCs busy.
    out = jax.block_until_ready(res_block_db(x, w1, b1, w2, b2))
    assert out.shape == (N, Cout, H, W)
    # bf16 matmul operands / bf16 mid staging with f32 accumulation.
    assert jnp.allclose(out, ref, rtol=5e-2, atol=5e-2), "mismatch vs reference"

    # Fused-image grid step: both images share one set of conv matmuls.
    out2 = jax.block_until_ready(
        res_block_db(x, w1, b1, w2, b2, images_per_block=2))
    assert jnp.allclose(out2, ref, rtol=5e-2, atol=5e-2), "mismatch (fused batch)"

    # Zero-bias configuration (the module's actual default init).
    b0 = jnp.zeros((Cout,), jnp.float32)
    ref0 = _reference(x, w1, b0, w2, b0)
    out0 = jax.block_until_ready(res_block_db(x, w1, b0, w2, b0))
    assert jnp.allclose(out0, ref0, rtol=5e-2, atol=5e-2), "mismatch (zero bias)"

    print("KERNEL_OK")
</pallas_src>

<mosaic_0001>
module attributes {stable_mosaic.version = 11 : i64} {
  func.func @_resblock_kernel(%arg0: i32, %arg1: memref<1x4x256xf32, #tpu.memory_space<vmem>>, %arg2: memref<9x4x4xbf16, #tpu.memory_space<vmem>>, %arg3: memref<4x1xf32, #tpu.memory_space<vmem>>, %arg4: memref<9x4x4xbf16, #tpu.memory_space<vmem>>, %arg5: memref<4x1xf32, #tpu.memory_space<vmem>>, %arg6: memref<1x4x256xf32, #tpu.memory_space<vmem>>, %arg7: memref<4x512xbf16, #tpu.memory_space<vmem>>, %arg8: memref<4x512xbf16, #tpu.memory_space<vmem>>) attributes {dimension_semantics = [#tpu.dimension_semantics<parallel>], iteration_bounds = array<i64: 2>, scalar_prefetch = 0 : i64, scratch_operands = 2 : i64, tpu.core_type = #tpu.core_type<tc>, window_params = [{transform_indices = @transform_0, window_bounds = array<i64: 1, 4, 256>}, {pipeline_mode = #tpu.pipeline_mode<synchronous>, transform_indices = @transform_1, window_bounds = array<i64: 9, 4, 4>}, {pipeline_mode = #tpu.pipeline_mode<synchronous>, transform_indices = @transform_2, window_bounds = array<i64: 4, 1>}, {pipeline_mode = #tpu.pipeline_mode<synchronous>, transform_indices = @transform_3, window_bounds = array<i64: 9, 4, 4>}, {pipeline_mode = #tpu.pipeline_mode<synchronous>, transform_indices = @transform_4, window_bounds = array<i64: 4, 1>}, {transform_indices = @transform_5, window_bounds = array<i64: 1, 4, 256>}]} {
    %0 = tpu.iota {dimensions = array<i32: 1>} : vector<1x256xi32>
    %c384_i32 = arith.constant 384 : i32
    %c0_i32 = arith.constant 0 : i32
    %1 = arith.cmpi eq, %c384_i32, %c0_i32 : i32
    %c1_i32 = arith.constant 1 : i32
    %2 = arith.select %1, %c1_i32, %c384_i32 : i32
    %3 = vector.broadcast %2 : i32 to vector<1x256xi32>
    %4 = arith.remsi %0, %3 : vector<1x256xi32>
    %c0_i32_0 = arith.constant 0 : i32
    %5 = vector.broadcast %c0_i32_0 : i32 to vector<1x256xi32>
    %6 = arith.cmpi ne, %4, %5 : vector<1x256xi32>
    %c0_i32_1 = arith.constant 0 : i32
    %7 = vector.broadcast %c0_i32_1 : i32 to vector<1x256xi32>
    %8 = arith.cmpi slt, %4, %7 : vector<1x256xi32>
    %c0_i32_2 = arith.constant 0 : i32
    %9 = arith.cmpi slt, %2, %c0_i32_2 : i32
    %10 = vector.broadcast %9 : i1 to vector<1x256xi1>
    %11 = vector.broadcast %10 : vector<1x256xi1> to vector<1x256xi1>
    %12 = arith.xori %8, %11 : vector<1x256xi1>
    %13 = arith.andi %12, %6 : vector<1x256xi1>
    %14 = vector.broadcast %2 : i32 to vector<1x256xi32>
    %15 = arith.addi %4, %14 : vector<1x256xi32>
    %16 = arith.select %13, %15, %4 : vector<1x256xi1>, vector<1x256xi32>
    %c16_i32 = arith.constant 16 : i32
    %c0_i32_3 = arith.constant 0 : i32
    %17 = arith.cmpi eq, %c16_i32, %c0_i32_3 : i32
    %c1_i32_4 = arith.constant 1 : i32
    %18 = arith.select %17, %c1_i32_4, %c16_i32 : i32
    %19 = vector.broadcast %18 : i32 to vector<1x256xi32>
    %20 = arith.remsi %16, %19 : vector<1x256xi32>
    %c0_i32_5 = arith.constant 0 : i32
    %21 = vector.broadcast %c0_i32_5 : i32 to vector<1x256xi32>
    %22 = arith.cmpi ne, %20, %21 : vector<1x256xi32>
    %c0_i32_6 = arith.constant 0 : i32
    %23 = vector.broadcast %c0_i32_6 : i32 to vector<1x256xi32>
    %24 = arith.cmpi slt, %20, %23 : vector<1x256xi32>
    %c0_i32_7 = arith.constant 0 : i32
    %25 = arith.cmpi slt, %18, %c0_i32_7 : i32
    %26 = vector.broadcast %25 : i1 to vector<1x256xi1>
    %27 = vector.broadcast %26 : vector<1x256xi1> to vector<1x256xi1>
    %28 = arith.xori %24, %27 : vector<1x256xi1>
    %29 = arith.andi %28, %22 : vector<1x256xi1>
    %30 = vector.broadcast %18 : i32 to vector<1x256xi32>
    %31 = arith.addi %20, %30 : vector<1x256xi32>
    %32 = arith.select %29, %31, %20 : vector<1x256xi1>, vector<1x256xi32>
    %c0_i32_8 = arith.constant 0 : i32
    %33 = vector.broadcast %c0_i32_8 : i32 to vector<1x256xi32>
    %34 = arith.cmpi ne, %32, %33 : vector<1x256xi32>
    %c15_i32 = arith.constant 15 : i32
    %35 = vector.broadcast %c15_i32 : i32 to vector<1x256xi32>
    %36 = arith.cmpi ne, %32, %35 : vector<1x256xi32>
    %cst = arith.constant 0.000000e+00 : bf16
    %37 = vector.broadcast %cst : bf16 to vector<4x128xbf16>
    %cst_9 = arith.constant 0.000000e+00 : bf16
    %38 = vector.broadcast %cst_9 : bf16 to vector<4x128xbf16>
    %c0 = arith.constant 0 : index
    %c0_10 = arith.constant 0 : index
    %39 = vector.load %arg7[%c0, %c0_10] : memref<4x512xbf16, #tpu.memory_space<vmem>>, vector<4x128xbf16>
    tpu.vector_store %arg7[%c0, %c0_10], %37 {strides = array<i32>} : memref<4x512xbf16, #tpu.memory_space<vmem>>, vector<4x128xbf16>,
    %c0_11 = arith.constant 0 : index
    %c0_12 = arith.constant 0 : index
    %40 = vector.load %arg8[%c0_11, %c0_12] : memref<4x512xbf16, #tpu.memory_space<vmem>>, vector<4x128xbf16>
    tpu.vector_store %arg8[%c0_11, %c0_12], %38 {strides = array<i32>} : memref<4x512xbf16, #tpu.memory_space<vmem>>, vector<4x128xbf16>,
    %c0_13 = arith.constant 0 : index
    %c384 = arith.constant 384 : index
    %41 = vector.load %arg7[%c0_13, %c384] : memref<4x512xbf16, #tpu.memory_space<vmem>>, vector<4x128xbf16>
    tpu.vector_store %arg7[%c0_13, %c384], %37 {strides = array<i32>} : memref<4x512xbf16, #tpu.memory_space<vmem>>, vector<4x128xbf16>,
    %c0_14 = arith.constant 0 : index
    %c384_15 = arith.constant 384 : index
    %42 = vector.load %arg8[%c0_14, %c384_15] : memref<4x512xbf16, #tpu.memory_space<vmem>>, vector<4x128xbf16>
    tpu.vector_store %arg8[%c0_14, %c384_15], %38 {strides = array<i32>} : memref<4x512xbf16, #tpu.memory_space<vmem>>, vector<4x128xbf16>,
    %c0_16 = arith.constant 0 : index
    %c0_17 = arith.constant 0 : index
    %c0_18 = arith.constant 0 : index
    %43 = vector.load %arg1[%c0_16, %c0_17, %c0_18] : memref<1x4x256xf32, #tpu.memory_space<vmem>>, vector<1x4x256xf32>
    %44 = vector.shape_cast %43 : vector<1x4x256xf32> to vector<4x256xf32>
    %45 = arith.truncf %44 : vector<4x256xf32> to vector<4x256xbf16>
    %c0_19 = arith.constant 0 : index
    %c128 = arith.constant 128 : index
    %46 = vector.load %arg7[%c0_19, %c128] : memref<4x512xbf16, #tpu.memory_space<vmem>>, vector<4x256xbf16>
    tpu.vector_store %arg7[%c0_19, %c128], %45 {strides = array<i32>} : memref<4x512xbf16, #tpu.memory_space<vmem>>, vector<4x256xbf16>,
    %cst_20 = arith.constant 0.000000e+00 : f32
    %47 = vector.broadcast %cst_20 : f32 to vector<4x256xf32>
    %c0_21 = arith.constant 0 : index
    %c111 = arith.constant 111 : index
    %48 = vector.load %arg7[%c0_21, %c111] : memref<4x512xbf16, #tpu.memory_space<vmem>>, vector<4x256xbf16>
    %c0_22 = arith.constant 0 : index
    %c0_23 = arith.constant 0 : index
    %c0_24 = arith.constant 0 : index
    %49 = vector.load %arg2[%c0_22, %c0_23, %c0_24] : memref<9x4x4xbf16, #tpu.memory_space<vmem>>, vector<1x4x4xbf16>
    %50 = vector.shape_cast %49 : vector<1x4x4xbf16> to vector<4x4xbf16>
    %cst_25 = arith.constant dense<0.000000e+00> : vector<4x256xf32>
    %51 = tpu.matmul %50, %48, %cst_25 {dimension_numbers = #tpu.dot_dimension_numbers<[1], [0], [0], [1], [0, 0, 1, 1], [], []>} : vector<4x4xbf16>, vector<4x256xbf16>, vector<4x256xf32> -> vector<4x256xf32>
    %cst_26 = arith.constant 0.000000e+00 : f32
    %52 = vector.shape_cast %34 : vector<1x256xi1> to vector<1x256xi1>
    %53 = vector.broadcast %52 : vector<1x256xi1> to vector<4x256xi1>
    %54 = vector.broadcast %cst_26 : f32 to vector<4x256xf32>
    %55 = arith.select %53, %51, %54 : vector<4x256xi1>, vector<4x256xf32>
    %56 = arith.addf %47, %55 : vector<4x256xf32>
    %c0_27 = arith.constant 0 : index
    %c112 = arith.constant 112 : index
    %57 = vector.load %arg7[%c0_27, %c112] : memref<4x512xbf16, #tpu.memory_space<vmem>>, vector<4x256xbf16>
    %c1 = arith.constant 1 : index
    %c0_28 = arith.constant 0 : index
    %c0_29 = arith.constant 0 : index
    %58 = vector.load %arg2[%c1, %c0_28, %c0_29] : memref<9x4x4xbf16, #tpu.memory_space<vmem>>, vector<1x4x4xbf16>
    %59 = vector.shape_cast %58 : vector<1x4x4xbf16> to vector<4x4xbf16>
    %cst_30 = arith.constant dense<0.000000e+00> : vector<4x256xf32>
    %60 = tpu.matmul %59, %57, %cst_30 {dimension_numbers = #tpu.dot_dimension_numbers<[1], [0], [0], [1], [0, 0, 1, 1], [], []>} : vector<4x4xbf16>, vector<4x256xbf16>, vector<4x256xf32> -> vector<4x256xf32>
    %61 = arith.addf %56, %60 : vector<4x256xf32>
    %c0_31 = arith.constant 0 : index
    %c113 = arith.constant 113 : index
    %62 = vector.load %arg7[%c0_31, %c113] : memref<4x512xbf16, #tpu.memory_space<vmem>>, vector<4x256xbf16>
    %c2 = arith.constant 2 : index
    %c0_32 = arith.constant 0 : index
    %c0_33 = arith.constant 0 : index
    %63 = vector.load %arg2[%c2, %c0_32, %c0_33] : memref<9x4x4xbf16, #tpu.memory_space<vmem>>, vector<1x4x4xbf16>
    %64 = vector.shape_cast %63 : vector<1x4x4xbf16> to vector<4x4xbf16>
    %cst_34 = arith.constant dense<0.000000e+00> : vector<4x256xf32>
    %65 = tpu.matmul %64, %62, %cst_34 {dimension_numbers = #tpu.dot_dimension_numbers<[1], [0], [0], [1], [0, 0, 1, 1], [], []>} : vector<4x4xbf16>, vector<4x256xbf16>, vector<4x256xf32> -> vector<4x256xf32>
    %cst_35 = arith.constant 0.000000e+00 : f32
    %66 = vector.shape_cast %36 : vector<1x256xi1> to vector<1x256xi1>
    %67 = vector.broadcast %66 : vector<1x256xi1> to vector<4x256xi1>
    %68 = vector.broadcast %cst_35 : f32 to vector<4x256xf32>
    %69 = arith.select %67, %65, %68 : vector<4x256xi1>, vector<4x256xf32>
    %70 = arith.addf %61, %69 : vector<4x256xf32>
    %c0_36 = arith.constant 0 : index
    %c127 = arith.constant 127 : index
    %71 = vector.load %arg7[%c0_36, %c127] : memref<4x512xbf16, #tpu.memory_space<vmem>>, vector<4x256xbf16>
    %c3 = arith.constant 3 : index
    %c0_37 = arith.constant 0 : index
    %c0_38 = arith.constant 0 : index
    %72 = vector.load %arg2[%c3, %c0_37, %c0_38] : memref<9x4x4xbf16, #tpu.memory_space<vmem>>, vector<1x4x4xbf16>
    %73 = vector.shape_cast %72 : vector<1x4x4xbf16> to vector<4x4xbf16>
    %cst_39 = arith.constant dense<0.000000e+00> : vector<4x256xf32>
    %74 = tpu.matmul %73, %71, %cst_39 {dimension_numbers = #tpu.dot_dimension_numbers<[1], [0], [0], [1], [0, 0, 1, 1], [], []>} : vector<4x4xbf16>, vector<4x256xbf16>, vector<4x256xf32> -> vector<4x256xf32>
    %cst_40 = arith.constant 0.000000e+00 : f32
    %75 = vector.shape_cast %34 : vector<1x256xi1> to vector<1x256xi1>
    %76 = vector.broadcast %75 : vector<1x256xi1> to vector<4x256xi1>
    %77 = vector.broadcast %cst_40 : f32 to vector<4x256xf32>
    %78 = arith.select %76, %74, %77 : vector<4x256xi1>, vector<4x256xf32>
    %79 = arith.addf %70, %78 : vector<4x256xf32>
    %c0_41 = arith.constant 0 : index
    %c128_42 = arith.constant 128 : index
    %80 = vector.load %arg7[%c0_41, %c128_42] : memref<4x512xbf16, #tpu.memory_space<vmem>>, vector<4x256xbf16>
    %c4 = arith.constant 4 : index
    %c0_43 = arith.constant 0 : index
    %c0_44 = arith.constant 0 : index
    %81 = vector.load %arg2[%c4, %c0_43, %c0_44] : memref<9x4x4xbf16, #tpu.memory_space<vmem>>, vector<1x4x4xbf16>
    %82 = vector.shape_cast %81 : vector<1x4x4xbf16> to vector<4x4xbf16>
    %cst_45 = arith.constant dense<0.000000e+00> : vector<4x256xf32>
    %83 = tpu.matmul %82, %80, %cst_45 {dimension_numbers = #tpu.dot_dimension_numbers<[1], [0], [0], [1], [0, 0, 1, 1], [], []>} : vector<4x4xbf16>, vector<4x256xbf16>, vector<4x256xf32> -> vector<4x256xf32>
    %84 = arith.addf %79, %83 : vector<4x256xf32>
    %c0_46 = arith.constant 0 : index
    %c129 = arith.constant 129 : index
    %85 = vector.load %arg7[%c0_46, %c129] : memref<4x512xbf16, #tpu.memory_space<vmem>>, vector<4x256xbf16>
    %c5 = arith.constant 5 : index
    %c0_47 = arith.constant 0 : index
    %c0_48 = arith.constant 0 : index
    %86 = vector.load %arg2[%c5, %c0_47, %c0_48] : memref<9x4x4xbf16, #tpu.memory_space<vmem>>, vector<1x4x4xbf16>
    %87 = vector.shape_cast %86 : vector<1x4x4xbf16> to vector<4x4xbf16>
    %cst_49 = arith.constant dense<0.000000e+00> : vector<4x256xf32>
    %88 = tpu.matmul %87, %85, %cst_49 {dimension_numbers = #tpu.dot_dimension_numbers<[1], [0], [0], [1], [0, 0, 1, 1], [], []>} : vector<4x4xbf16>, vector<4x256xbf16>, vector<4x256xf32> -> vector<4x256xf32>
    %cst_50 = arith.constant 0.000000e+00 : f32
    %89 = vector.shape_cast %36 : vector<1x256xi1> to vector<1x256xi1>
    %90 = vector.broadcast %89 : vector<1x256xi1> to vector<4x256xi1>
    %91 = vector.broadcast %cst_50 : f32 to vector<4x256xf32>
    %92 = arith.select %90, %88, %91 : vector<4x256xi1>, vector<4x256xf32>
    %93 = arith.addf %84, %92 : vector<4x256xf32>
    %c0_51 = arith.constant 0 : index
    %c143 = arith.constant 143 : index
    %94 = vector.load %arg7[%c0_51, %c143] : memref<4x512xbf16, #tpu.memory_space<vmem>>, vector<4x256xbf16>
    %c6 = arith.constant 6 : index
    %c0_52 = arith.constant 0 : index
    %c0_53 = arith.constant 0 : index
    %95 = vector.load %arg2[%c6, %c0_52, %c0_53] : memref<9x4x4xbf16, #tpu.memory_space<vmem>>, vector<1x4x4xbf16>
    %96 = vector.shape_cast %95 : vector<1x4x4xbf16> to vector<4x4xbf16>
    %cst_54 = arith.constant dense<0.000000e+00> : vector<4x256xf32>
    %97 = tpu.matmul %96, %94, %cst_54 {dimension_numbers = #tpu.dot_dimension_numbers<[1], [0], [0], [1], [0, 0, 1, 1], [], []>} : vector<4x4xbf16>, vector<4x256xbf16>, vector<4x256xf32> -> vector<4x256xf32>
    %cst_55 = arith.constant 0.000000e+00 : f32
    %98 = vector.shape_cast %34 : vector<1x256xi1> to vector<1x256xi1>
    %99 = vector.broadcast %98 : vector<1x256xi1> to vector<4x256xi1>
    %100 = vector.broadcast %cst_55 : f32 to vector<4x256xf32>
    %101 = arith.select %99, %97, %100 : vector<4x256xi1>, vector<4x256xf32>
    %102 = arith.addf %93, %101 : vector<4x256xf32>
    %c0_56 = arith.constant 0 : index
    %c144 = arith.constant 144 : index
    %103 = vector.load %arg7[%c0_56, %c144] : memref<4x512xbf16, #tpu.memory_space<vmem>>, vector<4x256xbf16>
    %c7 = arith.constant 7 : index
    %c0_57 = arith.constant 0 : index
    %c0_58 = arith.constant 0 : index
    %104 = vector.load %arg2[%c7, %c0_57, %c0_58] : memref<9x4x4xbf16, #tpu.memory_space<vmem>>, vector<1x4x4xbf16>
    %105 = vector.shape_cast %104 : vector<1x4x4xbf16> to vector<4x4xbf16>
    %cst_59 = arith.constant dense<0.000000e+00> : vector<4x256xf32>
    %106 = tpu.matmul %105, %103, %cst_59 {dimension_numbers = #tpu.dot_dimension_numbers<[1], [0], [0], [1], [0, 0, 1, 1], [], []>} : vector<4x4xbf16>, vector<4x256xbf16>, vector<4x256xf32> -> vector<4x256xf32>
    %107 = arith.addf %102, %106 : vector<4x256xf32>
    %c0_60 = arith.constant 0 : index
    %c145 = arith.constant 145 : index
    %108 = vector.load %arg7[%c0_60, %c145] : memref<4x512xbf16, #tpu.memory_space<vmem>>, vector<4x256xbf16>
    %c8 = arith.constant 8 : index
    %c0_61 = arith.constant 0 : index
    %c0_62 = arith.constant 0 : index
    %109 = vector.load %arg2[%c8, %c0_61, %c0_62] : memref<9x4x4xbf16, #tpu.memory_space<vmem>>, vector<1x4x4xbf16>
    %110 = vector.shape_cast %109 : vector<1x4x4xbf16> to vector<4x4xbf16>
    %cst_63 = arith.constant dense<0.000000e+00> : vector<4x256xf32>
    %111 = tpu.matmul %110, %108, %cst_63 {dimension_numbers = #tpu.dot_dimension_numbers<[1], [0], [0], [1], [0, 0, 1, 1], [], []>} : vector<4x4xbf16>, vector<4x256xbf16>, vector<4x256xf32> -> vector<4x256xf32>
    %cst_64 = arith.constant 0.000000e+00 : f32
    %112 = vector.shape_cast %36 : vector<1x256xi1> to vector<1x256xi1>
    %113 = vector.broadcast %112 : vector<1x256xi1> to vector<4x256xi1>
    %114 = vector.broadcast %cst_64 : f32 to vector<4x256xf32>
    %115 = arith.select %113, %111, %114 : vector<4x256xi1>, vector<4x256xf32>
    %116 = arith.addf %107, %115 : vector<4x256xf32>
    %c0_65 = arith.constant 0 : index
    %c0_66 = arith.constant 0 : index
    %117 = vector.load %arg3[%c0_65, %c0_66] : memref<4x1xf32, #tpu.memory_space<vmem>>, vector<4x1xf32>
    %118 = vector.broadcast %117 : vector<4x1xf32> to vector<4x256xf32>
    %119 = arith.addf %116, %118 : vector<4x256xf32>
    %cst_67 = arith.constant 0.000000e+00 : f32
    %120 = vector.broadcast %cst_67 : f32 to vector<4x256xf32>
    %121 = arith.maximumf %119, %120 : vector<4x256xf32>
    %122 = arith.truncf %121 : vector<4x256xf32> to vector<4x256xbf16>
    %c0_68 = arith.constant 0 : index
    %c128_69 = arith.constant 128 : index
    %123 = vector.load %arg8[%c0_68, %c128_69] : memref<4x512xbf16, #tpu.memory_space<vmem>>, vector<4x256xbf16>
    tpu.vector_store %arg8[%c0_68, %c128_69], %122 {strides = array<i32>} : memref<4x512xbf16, #tpu.memory_space<vmem>>, vector<4x256xbf16>,
    %cst_70 = arith.constant 0.000000e+00 : f32
    %124 = vector.broadcast %cst_70 : f32 to vector<4x256xf32>
    %c0_71 = arith.constant 0 : index
    %c111_72 = arith.constant 111 : index
    %125 = vector.load %arg8[%c0_71, %c111_72] : memref<4x512xbf16, #tpu.memory_space<vmem>>, vector<4x256xbf16>
    %c0_73 = arith.constant 0 : index
    %c0_74 = arith.constant 0 : index
    %c0_75 = arith.constant 0 : index
    %126 = vector.load %arg4[%c0_73, %c0_74, %c0_75] : memref<9x4x4xbf16, #tpu.memory_space<vmem>>, vector<1x4x4xbf16>
    %127 = vector.shape_cast %126 : vector<1x4x4xbf16> to vector<4x4xbf16>
    %cst_76 = arith.constant dense<0.000000e+00> : vector<4x256xf32>
    %128 = tpu.matmul %127, %125, %cst_76 {dimension_numbers = #tpu.dot_dimension_numbers<[1], [0], [0], [1], [0, 0, 1, 1], [], []>} : vector<4x4xbf16>, vector<4x256xbf16>, vector<4x256xf32> -> vector<4x256xf32>
    %cst_77 = arith.constant 0.000000e+00 : f32
    %129 = vector.shape_cast %34 : vector<1x256xi1> to vector<1x256xi1>
    %130 = vector.broadcast %129 : vector<1x256xi1> to vector<4x256xi1>
    %131 = vector.broadcast %cst_77 : f32 to vector<4x256xf32>
    %132 = arith.select %130, %128, %131 : vector<4x256xi1>, vector<4x256xf32>
    %133 = arith.addf %124, %132 : vector<4x256xf32>
    %c0_78 = arith.constant 0 : index
    %c112_79 = arith.constant 112 : index
    %134 = vector.load %arg8[%c0_78, %c112_79] : memref<4x512xbf16, #tpu.memory_space<vmem>>, vector<4x256xbf16>
    %c1_80 = arith.constant 1 : index
    %c0_81 = arith.constant 0 : index
    %c0_82 = arith.constant 0 : index
    %135 = vector.load %arg4[%c1_80, %c0_81, %c0_82] : memref<9x4x4xbf16, #tpu.memory_space<vmem>>, vector<1x4x4xbf16>
    %136 = vector.shape_cast %135 : vector<1x4x4xbf16> to vector<4x4xbf16>
    %cst_83 = arith.constant dense<0.000000e+00> : vector<4x256xf32>
    %137 = tpu.matmul %136, %134, %cst_83 {dimension_numbers = #tpu.dot_dimension_numbers<[1], [0], [0], [1], [0, 0, 1, 1], [], []>} : vector<4x4xbf16>, vector<4x256xbf16>, vector<4x256xf32> -> vector<4x256xf32>
    %138 = arith.addf %133, %137 : vector<4x256xf32>
    %c0_84 = arith.constant 0 : index
    %c113_85 = arith.constant 113 : index
    %139 = vector.load %arg8[%c0_84, %c113_85] : memref<4x512xbf16, #tpu.memory_space<vmem>>, vector<4x256xbf16>
    %c2_86 = arith.constant 2 : index
    %c0_87 = arith.constant 0 : index
    %c0_88 = arith.constant 0 : index
    %140 = vector.load %arg4[%c2_86, %c0_87, %c0_88] : memref<9x4x4xbf16, #tpu.memory_space<vmem>>, vector<1x4x4xbf16>
    %141 = vector.shape_cast %140 : vector<1x4x4xbf16> to vector<4x4xbf16>
    %cst_89 = arith.constant dense<0.000000e+00> : vector<4x256xf32>
    %142 = tpu.matmul %141, %139, %cst_89 {dimension_numbers = #tpu.dot_dimension_numbers<[1], [0], [0], [1], [0, 0, 1, 1], [], []>} : vector<4x4xbf16>, vector<4x256xbf16>, vector<4x256xf32> -> vector<4x256xf32>
    %cst_90 = arith.constant 0.000000e+00 : f32
    %143 = vector.shape_cast %36 : vector<1x256xi1> to vector<1x256xi1>
    %144 = vector.broadcast %143 : vector<1x256xi1> to vector<4x256xi1>
    %145 = vector.broadcast %cst_90 : f32 to vector<4x256xf32>
    %146 = arith.select %144, %142, %145 : vector<4x256xi1>, vector<4x256xf32>
    %147 = arith.addf %138, %146 : vector<4x256xf32>
    %c0_91 = arith.constant 0 : index
    %c127_92 = arith.constant 127 : index
    %148 = vector.load %arg8[%c0_91, %c127_92] : memref<4x512xbf16, #tpu.memory_space<vmem>>, vector<4x256xbf16>
    %c3_93 = arith.constant 3 : index
    %c0_94 = arith.constant 0 : index
    %c0_95 = arith.constant 0 : index
    %149 = vector.load %arg4[%c3_93, %c0_94, %c0_95] : memref<9x4x4xbf16, #tpu.memory_space<vmem>>, vector<1x4x4xbf16>
    %150 = vector.shape_cast %149 : vector<1x4x4xbf16> to vector<4x4xbf16>
    %cst_96 = arith.constant dense<0.000000e+00> : vector<4x256xf32>
    %151 = tpu.matmul %150, %148, %cst_96 {dimension_numbers = #tpu.dot_dimension_numbers<[1], [0], [0], [1], [0, 0, 1, 1], [], []>} : vector<4x4xbf16>, vector<4x256xbf16>, vector<4x256xf32> -> vector<4x256xf32>
    %cst_97 = arith.constant 0.000000e+00 : f32
    %152 = vector.shape_cast %34 : vector<1x256xi1> to vector<1x256xi1>
    %153 = vector.broadcast %152 : vector<1x256xi1> to vector<4x256xi1>
    %154 = vector.broadcast %cst_97 : f32 to vector<4x256xf32>
    %155 = arith.select %153, %151, %154 : vector<4x256xi1>, vector<4x256xf32>
    %156 = arith.addf %147, %155 : vector<4x256xf32>
    %c0_98 = arith.constant 0 : index
    %c128_99 = arith.constant 128 : index
    %157 = vector.load %arg8[%c0_98, %c128_99] : memref<4x512xbf16, #tpu.memory_space<vmem>>, vector<4x256xbf16>
    %c4_100 = arith.constant 4 : index
    %c0_101 = arith.constant 0 : index
    %c0_102 = arith.constant 0 : index
    %158 = vector.load %arg4[%c4_100, %c0_101, %c0_102] : memref<9x4x4xbf16, #tpu.memory_space<vmem>>, vector<1x4x4xbf16>
    %159 = vector.shape_cast %158 : vector<1x4x4xbf16> to vector<4x4xbf16>
    %cst_103 = arith.constant dense<0.000000e+00> : vector<4x256xf32>
    %160 = tpu.matmul %159, %157, %cst_103 {dimension_numbers = #tpu.dot_dimension_numbers<[1], [0], [0], [1], [0, 0, 1, 1], [], []>} : vector<4x4xbf16>, vector<4x256xbf16>, vector<4x256xf32> -> vector<4x256xf32>
    %161 = arith.addf %156, %160 : vector<4x256xf32>
    %c0_104 = arith.constant 0 : index
    %c129_105 = arith.constant 129 : index
    %162 = vector.load %arg8[%c0_104, %c129_105] : memref<4x512xbf16, #tpu.memory_space<vmem>>, vector<4x256xbf16>
    %c5_106 = arith.constant 5 : index
    %c0_107 = arith.constant 0 : index
    %c0_108 = arith.constant 0 : index
    %163 = vector.load %arg4[%c5_106, %c0_107, %c0_108] : memref<9x4x4xbf16, #tpu.memory_space<vmem>>, vector<1x4x4xbf16>
    %164 = vector.shape_cast %163 : vector<1x4x4xbf16> to vector<4x4xbf16>
    %cst_109 = arith.constant dense<0.000000e+00> : vector<4x256xf32>
    %165 = tpu.matmul %164, %162, %cst_109 {dimension_numbers = #tpu.dot_dimension_numbers<[1], [0], [0], [1], [0, 0, 1, 1], [], []>} : vector<4x4xbf16>, vector<4x256xbf16>, vector<4x256xf32> -> vector<4x256xf32>
    %cst_110 = arith.constant 0.000000e+00 : f32
    %166 = vector.shape_cast %36 : vector<1x256xi1> to vector<1x256xi1>
    %167 = vector.broadcast %166 : vector<1x256xi1> to vector<4x256xi1>
    %168 = vector.broadcast %cst_110 : f32 to vector<4x256xf32>
    %169 = arith.select %167, %165, %168 : vector<4x256xi1>, vector<4x256xf32>
    %170 = arith.addf %161, %169 : vector<4x256xf32>
    %c0_111 = arith.constant 0 : index
    %c143_112 = arith.constant 143 : index
    %171 = vector.load %arg8[%c0_111, %c143_112] : memref<4x512xbf16, #tpu.memory_space<vmem>>, vector<4x256xbf16>
    %c6_113 = arith.constant 6 : index
    %c0_114 = arith.constant 0 : index
    %c0_115 = arith.constant 0 : index
    %172 = vector.load %arg4[%c6_113, %c0_114, %c0_115] : memref<9x4x4xbf16, #tpu.memory_space<vmem>>, vector<1x4x4xbf16>
    %173 = vector.shape_cast %172 : vector<1x4x4xbf16> to vector<4x4xbf16>
    %cst_116 = arith.constant dense<0.000000e+00> : vector<4x256xf32>
    %174 = tpu.matmul %173, %171, %cst_116 {dimension_numbers = #tpu.dot_dimension_numbers<[1], [0], [0], [1], [0, 0, 1, 1], [], []>} : vector<4x4xbf16>, vector<4x256xbf16>, vector<4x256xf32> -> vector<4x256xf32>
    %cst_117 = arith.constant 0.000000e+00 : f32
    %175 = vector.shape_cast %34 : vector<1x256xi1> to vector<1x256xi1>
    %176 = vector.broadcast %175 : vector<1x256xi1> to vector<4x256xi1>
    %177 = vector.broadcast %cst_117 : f32 to vector<4x256xf32>
    %178 = arith.select %176, %174, %177 : vector<4x256xi1>, vector<4x256xf32>
    %179 = arith.addf %170, %178 : vector<4x256xf32>
    %c0_118 = arith.constant 0 : index
    %c144_119 = arith.constant 144 : index
    %180 = vector.load %arg8[%c0_118, %c144_119] : memref<4x512xbf16, #tpu.memory_space<vmem>>, vector<4x256xbf16>
    %c7_120 = arith.constant 7 : index
    %c0_121 = arith.constant 0 : index
    %c0_122 = arith.constant 0 : index
    %181 = vector.load %arg4[%c7_120, %c0_121, %c0_122] : memref<9x4x4xbf16, #tpu.memory_space<vmem>>, vector<1x4x4xbf16>
    %182 = vector.shape_cast %181 : vector<1x4x4xbf16> to vector<4x4xbf16>
    %cst_123 = arith.constant dense<0.000000e+00> : vector<4x256xf32>
    %183 = tpu.matmul %182, %180, %cst_123 {dimension_numbers = #tpu.dot_dimension_numbers<[1], [0], [0], [1], [0, 0, 1, 1], [], []>} : vector<4x4xbf16>, vector<4x256xbf16>, vector<4x256xf32> -> vector<4x256xf32>
    %184 = arith.addf %179, %183 : vector<4x256xf32>
    %c0_124 = arith.constant 0 : index
    %c145_125 = arith.constant 145 : index
    %185 = vector.load %arg8[%c0_124, %c145_125] : memref<4x512xbf16, #tpu.memory_space<vmem>>, vector<4x256xbf16>
    %c8_126 = arith.constant 8 : index
    %c0_127 = arith.constant 0 : index
    %c0_128 = arith.constant 0 : index
    %186 = vector.load %arg4[%c8_126, %c0_127, %c0_128] : memref<9x4x4xbf16, #tpu.memory_space<vmem>>, vector<1x4x4xbf16>
    %187 = vector.shape_cast %186 : vector<1x4x4xbf16> to vector<4x4xbf16>
    %cst_129 = arith.constant dense<0.000000e+00> : vector<4x256xf32>
    %188 = tpu.matmul %187, %185, %cst_129 {dimension_numbers = #tpu.dot_dimension_numbers<[1], [0], [0], [1], [0, 0, 1, 1], [], []>} : vector<4x4xbf16>, vector<4x256xbf16>, vector<4x256xf32> -> vector<4x256xf32>
    %cst_130 = arith.constant 0.000000e+00 : f32
    %189 = vector.shape_cast %36 : vector<1x256xi1> to vector<1x256xi1>
    %190 = vector.broadcast %189 : vector<1x256xi1> to vector<4x256xi1>
    %191 = vector.broadcast %cst_130 : f32 to vector<4x256xf32>
    %192 = arith.select %190, %188, %191 : vector<4x256xi1>, vector<4x256xf32>
    %193 = arith.addf %184, %192 : vector<4x256xf32>
    %c0_131 = arith.constant 0 : index
    %c0_132 = arith.constant 0 : index
    %194 = vector.load %arg5[%c0_131, %c0_132] : memref<4x1xf32, #tpu.memory_space<vmem>>, vector<4x1xf32>
    %195 = vector.broadcast %194 : vector<4x1xf32> to vector<4x256xf32>
    %196 = arith.addf %193, %195 : vector<4x256xf32>
    %c0_133 = arith.constant 0 : index
    %c0_134 = arith.constant 0 : index
    %c0_135 = arith.constant 0 : index
    %197 = vector.load %arg1[%c0_133, %c0_134, %c0_135] : memref<1x4x256xf32, #tpu.memory_space<vmem>>, vector<1x4x256xf32>
    %198 = vector.shape_cast %197 : vector<1x4x256xf32> to vector<4x256xf32>
    %199 = arith.addf %198, %196 : vector<4x256xf32>
    %c0_136 = arith.constant 0 : index
    %c0_137 = arith.constant 0 : index
    %c0_138 = arith.constant 0 : index
    %200 = vector.load %arg6[%c0_136, %c0_137, %c0_138] : memref<1x4x256xf32, #tpu.memory_space<vmem>>, vector<1x4x256xf32>
    %201 = vector.shape_cast %200 : vector<1x4x256xf32> to vector<4x256xf32>
    %202 = vector.shape_cast %199 : vector<4x256xf32> to vector<1x4x256xf32>
    tpu.vector_store %arg6[%c0_136, %c0_137, %c0_138], %202 {strides = array<i32>} : memref<1x4x256xf32, #tpu.memory_space<vmem>>, vector<1x4x256xf32>,
    return
  }
  func.func @transform_0(%arg0: i32) -> (i32, i32, i32) {
    %c0_i32 = arith.constant 0 : i32
    %c0_i32_0 = arith.constant 0 : i32
    %c0_i32_1 = arith.constant 0 : i32
    return %arg0, %c0_i32, %c0_i32_0 : i32, i32, i32
  }
  func.func @transform_1(%arg0: i32) -> (i32, i32, i32) {
    %c0_i32 = arith.constant 0 : i32
    %c0_i32_0 = arith.constant 0 : i32
    %c0_i32_1 = arith.constant 0 : i32
    %c0_i32_2 = arith.constant 0 : i32
    return %c0_i32, %c0_i32_0, %c0_i32_1 : i32, i32, i32
  }
  func.func @transform_2(%arg0: i32) -> (i32, i32) {
    %c0_i32 = arith.constant 0 : i32
    %c0_i32_0 = arith.constant 0 : i32
    %c0_i32_1 = arith.constant 0 : i32
    return %c0_i32, %c0_i32_0 : i32, i32
  }
  func.func @transform_3(%arg0: i32) -> (i32, i32, i32) {
    %c0_i32 = arith.constant 0 : i32
    %c0_i32_0 = arith.constant 0 : i32
    %c0_i32_1 = arith.constant 0 : i32
    %c0_i32_2 = arith.constant 0 : i32
    return %c0_i32, %c0_i32_0, %c0_i32_1 : i32, i32, i32
  }
  func.func @transform_4(%arg0: i32) -> (i32, i32) {
    %c0_i32 = arith.constant 0 : i32
    %c0_i32_0 = arith.constant 0 : i32
    %c0_i32_1 = arith.constant 0 : i32
    return %c0_i32, %c0_i32_0 : i32, i32
  }
  func.func @transform_5(%arg0: i32) -> (i32, i32, i32) {
    %c0_i32 = arith.constant 0 : i32
    %c0_i32_0 = arith.constant 0 : i32
    %c0_i32_1 = arith.constant 0 : i32
    return %arg0, %c0_i32, %c0_i32_0 : i32, i32, i32
  }
}

</mosaic_0001>

<llo_original>
// kernel: tpu_custom_call.1
$region0: #{tpu_custom_call.1}
  #allocation0 [shape = 'u32[]', space=smem, size = 0x4, offset = 0x4, fixed_abs, tag = 'smem constant byte address 0x4 - core index']
  #allocation1 [shape = 'u32[144,128]{1,0:T(1,128)}', space=vmem, size = 0x12000, scoped, tag = 'internal scratch']
  #allocation2 [shape = 'bf16[4,512]{1,0:T(4,128)(2,1)}', space=vmem, size = 0x1000, scoped, tag = 'scratch operand']
  #allocation3 [shape = 'bf16[4,512]{1,0:T(4,128)(2,1)}', space=vmem, size = 0x1000, scoped, tag = 'scratch operand']
  %s0 = inlined_call_operand.vmem [shape: f32[2,4,256], index: 0, kind: input, shape index: {}]
  %s1 = inlined_call_operand.vmem [shape: bf16[9,4,4], index: 1, kind: input, shape index: {}]
  %s2 = inlined_call_operand.vmem [shape: f32[4,1], index: 2, kind: input, shape index: {}]
  %s3 = inlined_call_operand.vmem [shape: bf16[9,4,4], index: 3, kind: input, shape index: {}]
  %s4 = inlined_call_operand.vmem [shape: f32[4,1], index: 4, kind: input, shape index: {}]
  %s5 = inlined_call_operand.hbm [shape: f32[2,4,256], index: 5, kind: output, shape index: {}]
  %s6 = sld [smem:[#allocation0]]
  $region53: #{tpu_custom_call.1} parent=0
    _
  %s8 = ssub.s32 1, %s6
  %s9 = scalar_select 0, %s8, %s6
  $region1: #{tpu_custom_call.1} parent=0
    #allocation4 [shape = 'u8[8192]{0}', space=vmem, size = 0x2000, scoped, tag = 'output window, operand 0']
    #allocation5 [shape = 's32[2]{0}', space=sflag, size = 0x8, scoped, tag = 'scoped memory for tpu_custom_call.1']
    %10 = vsyncpa [#allocation5], 0
    %s11 = scalar_lea.sflag [#allocation5], 1
    %12 = vsyncpa %s11, 0
    loop: start=0, step=1, limit=4
    $region2: #{tpu_custom_call.1} parent=1 // loop_pre_header
      _
    $region3: #{tpu_custom_call.1} parent=1 // loop_header
      %s14 = sphi 0, %s18
      %p15 = scmp.ge.s32.totalorder %s14, 4
      %s24 = sphi 0, %s26
      %s27 = sphi 0, %s24
      %s28 = sphi 0, %s27
      %s44 = sphi 0, %s28
      %s48 = sphi 0, %s48
      %s50 = sphi 0, %s48
      %s51 = sphi 0, %s50
      %s65 = sphi 0, %s51
      %s69 = sphi 0, %s69
      %s71 = sphi 0, %s69
      %s72 = sphi 0, %s71
      %s86 = sphi 0, %s72
      %s90 = sphi 0, %s90
      %s92 = sphi 0, %s90
      %s93 = sphi 0, %s92
      %s107 = sphi 0, %s93
      %s111 = sphi 0, %s111
      %s113 = sphi 0, %s111
      %s114 = sphi 0, %s113
      %s128 = sphi 0, %s114
      %s134 = sphi 0, %s136
      %s137 = sphi 0, %s134
      %s138 = sphi 0, %s137
      %s154 = sphi 0, %s138
    $region4: #{tpu_custom_call.1} parent=1 // loop_header_branch
      %17 = sbr.rel (%p15) target = $region8
    $region5: #{tpu_custom_call.1} parent=1 // loop_body
      %s19 = ssub.s32 %s14, 1
      %s20 = ssub.s32 %s14, 2
      %s21 = sadd.s32 %s14, 1
      %s22 = ssub.s32 %s14, %s21
      %p23 = scmp.eq.s32.totalorder %s22, 0
      %s25 = sadd.s32 %s24, 1
      %s26 = scalar_select %p23, %s24, %s25
      %p29 = pneg %p23
      %p30 = scmp.eq.s32.totalorder %s14, 1
      %p31 = por %p29, %p30
      %p32 = scmp.ne.s32.totalorder %s24, %s27
      %p33 = scmp.eq.s32.totalorder %s14, 0
      %p34 = por %p32, %p33
      %p35 = scmp.ne.s32.totalorder %s24, %s27
      %p36 = scmp.eq.s32.totalorder %s19, 1
      %p37 = por %p35, %p36
      %p38 = scmp.ne.s32.totalorder %s27, %s28
      %p39 = scmp.eq.s32.totalorder %s19, 0
      %p40 = por %p38, %p39
      %p41 = scmp.ne.s32.totalorder %s27, %s28
      %p42 = scmp.eq.s32.totalorder %s20, 1
      %p43 = por %p41, %p42
      %p45 = scmp.ne.s32.totalorder %s28, %s44
      %p46 = scmp.eq.s32.totalorder %s20, 0
      %p47 = por %p45, %p46
      %s49 = sadd.s32 %s48, 1
      %p52 = scmp.eq.s32.totalorder %s14, 1
      %p53 = scmp.ne.s32.totalorder %s48, %s50
      %p54 = scmp.eq.s32.totalorder %s14, 0
      %p55 = por %p53, %p54
      %p56 = scmp.ne.s32.totalorder %s48, %s50
      %p57 = scmp.eq.s32.totalorder %s19, 1
      %p58 = por %p56, %p57
      %p59 = scmp.ne.s32.totalorder %s50, %s51
      %p60 = scmp.eq.s32.totalorder %s19, 0
      %p61 = por %p59, %p60
      %p62 = scmp.ne.s32.totalorder %s50, %s51
      %p63 = scmp.eq.s32.totalorder %s20, 1
      %p64 = por %p62, %p63
      %p66 = scmp.ne.s32.totalorder %s51, %s65
      %p67 = scmp.eq.s32.totalorder %s20, 0
      %p68 = por %p66, %p67
      %s70 = sadd.s32 %s69, 1
      %p73 = scmp.eq.s32.totalorder %s14, 1
      %p74 = scmp.ne.s32.totalorder %s69, %s71
      %p75 = scmp.eq.s32.totalorder %s14, 0
      %p76 = por %p74, %p75
      %p77 = scmp.ne.s32.totalorder %s69, %s71
      %p78 = scmp.eq.s32.totalorder %s19, 1
      %p79 = por %p77, %p78
      %p80 = scmp.ne.s32.totalorder %s71, %s72
      %p81 = scmp.eq.s32.totalorder %s19, 0
      %p82 = por %p80, %p81
      %p83 = scmp.ne.s32.totalorder %s71, %s72
      %p84 = scmp.eq.s32.totalorder %s20, 1
      %p85 = por %p83, %p84
      %p87 = scmp.ne.s32.totalorder %s72, %s86
      %p88 = scmp.eq.s32.totalorder %s20, 0
      %p89 = por %p87, %p88
      %s91 = sadd.s32 %s90, 1
      %p94 = scmp.eq.s32.totalorder %s14, 1
      %p95 = scmp.ne.s32.totalorder %s90, %s92
      %p96 = scmp.eq.s32.totalorder %s14, 0
      %p97 = por %p95, %p96
      %p98 = scmp.ne.s32.totalorder %s90, %s92
      %p99 = scmp.eq.s32.totalorder %s19, 1
      %p100 = por %p98, %p99
      %p101 = scmp.ne.s32.totalorder %s92, %s93
      %p102 = scmp.eq.s32.totalorder %s19, 0
      %p103 = por %p101, %p102
      %p104 = scmp.ne.s32.totalorder %s92, %s93
      %p105 = scmp.eq.s32.totalorder %s20, 1
      %p106 = por %p104, %p105
      %p108 = scmp.ne.s32.totalorder %s93, %s107
      %p109 = scmp.eq.s32.totalorder %s20, 0
      %p110 = por %p108, %p109
      %s112 = sadd.s32 %s111, 1
      %p115 = scmp.eq.s32.totalorder %s14, 1
      %p116 = scmp.ne.s32.totalorder %s111, %s113
      %p117 = scmp.eq.s32.totalorder %s14, 0
      %p118 = por %p116, %p117
      %p119 = scmp.ne.s32.totalorder %s111, %s113
      %p120 = scmp.eq.s32.totalorder %s19, 1
      %p121 = por %p119, %p120
      %p122 = scmp.ne.s32.totalorder %s113, %s114
      %p123 = scmp.eq.s32.totalorder %s19, 0
      %p124 = por %p122, %p123
      %p125 = scmp.ne.s32.totalorder %s113, %s114
      %p126 = scmp.eq.s32.totalorder %s20, 1
      %p127 = por %p125, %p126
      %p129 = scmp.ne.s32.totalorder %s114, %s128
      %p130 = scmp.eq.s32.totalorder %s20, 0
      %p131 = por %p129, %p130
      %s132 = ssub.s32 %s14, %s21
      %p133 = scmp.eq.s32.totalorder %s132, 0
      %s135 = sadd.s32 %s134, 1
      %s136 = scalar_select %p133, %s134, %s135
      %p139 = pneg %p133
      %p140 = scmp.eq.s32.totalorder %s14, 1
      %p141 = por %p139, %p140
      %p142 = scmp.ne.s32.totalorder %s134, %s137
      %p143 = scmp.eq.s32.totalorder %s14, 0
      %p144 = por %p142, %p143
      %p145 = scmp.ne.s32.totalorder %s134, %s137
      %p146 = scmp.eq.s32.totalorder %s19, 1
      %p147 = por %p145, %p146
      %p148 = scmp.ne.s32.totalorder %s137, %s138
      %p149 = scmp.eq.s32.totalorder %s19, 0
      %p150 = por %p148, %p149
      %p151 = scmp.ne.s32.totalorder %s137, %s138
      %p152 = scmp.eq.s32.totalorder %s20, 1
      %p153 = por %p151, %p152
      %p155 = scmp.ne.s32.totalorder %s138, %s154
      %p156 = scmp.eq.s32.totalorder %s20, 0
      %p157 = por %p155, %p156
      %p158 = scmp.le.s32.totalorder 1, %s14
      %p159 = scmp.lt.s32.totalorder %s14, 3
      %p160 = pnand %p158, %p159
      %p161 = pneg %p160
      // Predicated region
      $region9: #{tpu_custom_call.1} parent=5 // pred_check
        _
      $region10: #{tpu_custom_call.1} parent=5 // pred_check_branch
        %163 = sbr.rel (%p160) target = $region12
      $region11: #{tpu_custom_call.1} parent=5 // pred_region
        %s164 = ssub.s32 %s14, 1
        // Predicated region
        $region13: #{tpu_custom_call.1} parent=11 // pred_check
          %p165 = pneg %p61
        $region14: #{tpu_custom_call.1} parent=11 // pred_check_branch
          %167 = sbr.rel (%p165) target = $region16
        $region15: #{tpu_custom_call.1} parent=11 // pred_region
          _
        $region16: #{tpu_custom_call.1} parent=11 // pred_fallthru
          _
        // Predicated region
        $region17: #{tpu_custom_call.1} parent=11 // pred_check
          %p168 = pneg %p82
        $region18: #{tpu_custom_call.1} parent=11 // pred_check_branch
          %170 = sbr.rel (%p168) target = $region20
        $region19: #{tpu_custom_call.1} parent=11 // pred_region
          _
        $region20: #{tpu_custom_call.1} parent=11 // pred_fallthru
          _
        // Predicated region
        $region21: #{tpu_custom_call.1} parent=11 // pred_check
          %p171 = pneg %p103
        $region22: #{tpu_custom_call.1} parent=11 // pred_check_branch
          %173 = sbr.rel (%p171) target = $region24
        $region23: #{tpu_custom_call.1} parent=11 // pred_region
          _
        $region24: #{tpu_custom_call.1} parent=11 // pred_fallthru
          _
        // Predicated region
        $region25: #{tpu_custom_call.1} parent=11 // pred_check
          %p174 = pneg %p124
        $region26: #{tpu_custom_call.1} parent=11 // pred_check_branch
          %176 = sbr.rel (%p174) target = $region28
        $region27: #{tpu_custom_call.1} parent=11 // pred_region
          _
        $region28: #{tpu_custom_call.1} parent=11 // pred_fallthru
          _
      $region12: #{tpu_custom_call.1} parent=5 // pred_fallthru
        _
      %p177 = scmp.lt.s32.totalorder %s14, 2
      // Predicated region
      $region29: #{tpu_custom_call.1} parent=5 // pred_check
        %p178 = pneg %p177
      $region30: #{tpu_custom_call.1} parent=5 // pred_check_branch
        %180 = sbr.rel (%p178) target = $region32
      $region31: #{tpu_custom_call.1} parent=5 // pred_region
        // Predicated region
        $region33: #{tpu_custom_call.1} parent=31 // pred_check
          %p181 = pneg %p34
        $region34: #{tpu_custom_call.1} parent=31 // pred_check_branch
          %183 = sbr.rel (%p181) target = $region36
        $region35: #{tpu_custom_call.1} parent=31 // pred_region
          %p184 = scmp.lt.s32.totalorder %s14, 1
          %s185 = scalar_select %p184, %s14, 1
          %s186 = smul.addr %s185, 2
          %s187 = smul.addr %s186, 4
          %s188 = scalar_lea.vmem %s0, %s187
        $region36: #{tpu_custom_call.1} parent=31 // pred_fallthru
          _
      $region32: #{tpu_custom_call.1} parent=5 // pred_fallthru
        _
      %p189 = scmp.le.s32.totalorder 1, %s14
      %p190 = scmp.lt.s32.totalorder %s14, 3
      %p191 = pnand %p189, %p190
      %p192 = pneg %p191
      // Predicated region
      $region37: #{tpu_custom_call.1} parent=5 // pred_check
        _
      $region38: #{tpu_custom_call.1} parent=5 // pred_check_branch
        %194 = sbr.rel (%p191) target = $region40
      $region39: #{tpu_custom_call.1} parent=5 // pred_region
        %s195 = ssub.s32 %s14, 1
        %p196 = scmp.lt.s32.totalorder %s19, 1
        %s197 = scalar_select %p196, %s19, 1
        %s198 = smul.addr %s197, 2
        %s199 = smul.addr %s198, 4
        %s200 = scalar_lea.vmem %s0, %s199
        %p201 = pneg %p40
        %p202 = pneg %p37
        %p203 = pneg %p61
        %p204 = pneg %p58
        %p205 = pneg %p82
        %p206 = pneg %p79
        %p207 = pneg %p103
        %p208 = pneg %p100
        %p209 = pneg %p124
        %p210 = pneg %p121
        %p211 = pneg %p150
        %p212 = pneg %p147
        %s213 = sand.u32 %s137, 1
        %s214 = scalar_lea.sflag [#allocation5], %s213
        %s215 = sand.u32 %s137, 1
        %s216 = smul.addr %s215, 8
        %s217 = scalar_lea.vmem [#allocation4], %s216
        %p218 = scmp.lt.s32.totalorder %s19, 1
        %s219 = scalar_select %p218, %s19, 1
        %s220 = smul.addr %s219, 2
        %s221 = smul.addr %s220, 4
        %s222 = scalar_lea.vmem %s0, %s221
        %v224 = vlaneseq
        %v225 = vand.u32 %v224, 127
        %v226 = vadd.s32 %v225, 128
        %vm227 = vcmp.lt.s32.totalorder %v225, 0
        %v228 = vsub.s32 0, %v225
        %v229 = vsel %vm227, %v228, %v225
        %v230 = vmul.u32.u64.compose %v229, 2863311531
        %v231 = vextract.low.u32 %v230
        %v232 = vextract.high.u32 %v230
        %v233 = vshrl.u32 %v232, 8
        %v234 = vmul.u32 %v233, 384
        %v235 = vsub.s32 %v229, %v234
        %v236 = vsub.s32 0, %v235
        %v237 = vsel %vm227, %v236, %v235
        %vm238 = vcmp.lt.s32.totalorder %v226, 0
        %v239 = vsub.s32 0, %v226
        %v240 = vsel %vm238, %v239, %v226
        %v241 = vmul.u32.u64.compose %v240, 2863311531
        %v242 = vextract.low.u32 %v241
        %v243 = vextract.high.u32 %v241
        %v244 = vshrl.u32 %v243, 8
        %v245 = vmul.u32 %v244, 384
        %v246 = vsub.s32 %v240, %v245
        %v247 = vsub.s32 0, %v246
        %v248 = vsel %vm238, %v247, %v246
        %vm249 = vcmp.ne.s32.totalorder %v237, 0
        %vm250 = vcmp.ne.s32.totalorder %v248, 0
        %vm251 = vcmp.lt.s32.totalorder %v237, 0
        %vm252 = vcmp.lt.s32.totalorder %v248, 0
        %vm253 = vmand %vm251, %vm249
        %vm254 = vmand %vm252, %vm250
        %v255 = vadd.s32 %v237, 384
        %v256 = vadd.s32 %v248, 384
        %v257 = vsel %vm253, %v255, %v237
        %v258 = vsel %vm254, %v256, %v248
        %vm259 = vcmp.lt.s32.totalorder %v257, 0
        %v260 = vsub.s32 0, %v257
        %v261 = vsel %vm259, %v260, %v257
        %v262 = vshrl.u32 %v261, 4
        %v263 = vand.u32 %v261, 15
        %v264 = vsub.s32 0, %v263
        %v265 = vsel %vm259, %v264, %v263
        %vm266 = vcmp.lt.s32.totalorder %v258, 0
        %v267 = vsub.s32 0, %v258
        %v268 = vsel %vm266, %v267, %v258
        %v269 = vshrl.u32 %v268, 4
        %v270 = vand.u32 %v268, 15
        %v271 = vsub.s32 0, %v270
        %v272 = vsel %vm266, %v271, %v270
        %vm273 = vcmp.ne.s32.totalorder %v265, 0
        %vm274 = vcmp.ne.s32.totalorder %v272, 0
        %vm275 = vcmp.lt.s32.totalorder %v265, 0
        %vm276 = vcmp.lt.s32.totalorder %v272, 0
        %vm277 = vmand %vm275, %vm273
        %vm278 = vmand %vm276, %vm274
        %v279 = vadd.s32 %v265, 16
        %v280 = vadd.s32 %v272, 16
        %v281 = vsel %vm277, %v279, %v265
        %v282 = vsel %vm278, %v280, %v272
        %vm283 = vcmp.ne.s32.totalorder %v281, 0
        %vm284 = vcmp.ne.s32.totalorder %v282, 0
        %vm285 = vcmp.ne.s32.totalorder %v281, 15
        %vm286 = vcmp.ne.s32.totalorder %v282, 15
        %287 = vst [vmem:[#allocation2] sm:$0x3] 0
        %288 = vst [vmem:[#allocation3] sm:$0x3] 0
        %289 = vst [vmem:[#allocation2 + $0x6] sm:$0x3] 0
        %290 = vst [vmem:[#allocation3 + $0x6] sm:$0x3] 0
        %v291 = vld [vmem:[%s222] sm:$0xff]
        %v293 = vcombine.high %v291, %v291
        %v295 = vpack.c.bf16 %v291, %v291
        %v296 = vpack.c.bf16 %v293, %v293
        %v299 = vcombine.low %v295, %v296
        %v301 = vunpack.c.l.s4 1983009808
        %v302 = vunpack.c.0.s8 %v301
        %v303 = vlaneseq
        %v304 = vshrl.u32 %v303, 7
        %v305 = vsub.s32 %v302, %v304
        %v306 = vrot.slane %v299, %v305
        %308 = vst [vmem:[#allocation2 + $0x2] sm:$0xf] %v306
        %v309 = vld [vmem:[#allocation2] sm:$0x3f]
        %v310 = vld [vmem:[%s1] sm:$0x3]
        %v312 = vcombine.high %v309, %v309
        %v314 = vunpack.c.l.s4 1983009808
        %v315 = vunpack.c.0.s8 %v314
        %v316 = vlaneseq
        %v317 = vshrl.u32 %v316, 7
        %v318 = vsub.s32 %v315, %v317
        %v319 = vrot.slane %v309, %v318
        %v321 = vunpack.c.l.s4 1983009808
        %v322 = vunpack.c.0.s8 %v321
        %v323 = vlaneseq
        %v324 = vshrl.u32 %v323, 7
        %v325 = vsub.s32 %v322, %v324
        %v326 = vrot.slane %v312, %v325
        %v327 = vcombine.high %v319, %v319
        %328 = vrot.lane.b32.xlu0 %v319, 17
        %v329 = vpop.permute.xlu0 %328
        %330 = vrot.lane.b32.xlu0 %v327, 17
        %v331 = vpop.permute.xlu0 %330
        %332 = vrot.lane.b32.xlu0 %v326, 17
        %v333 = vpop.permute.xlu0 %332
        %vm334 = vcmask 138240
        %v335 = vsel %vm334, %v329, %v331
        %v336 = vsel %vm334, %v331, %v333
        %vm337 = vcmask 31744
        %v339 = vsel %vm337, %v310, 0
        %vm341 = vcmask 1041408
        %v343 = vsel %vm341, %v335, 0
        %v346 = vsel %vm341, %v336, 0
        %348 = vmatprep.subr.bf16.mxu0 %v346
        %349 = vmatpush1.bf16.msra.mxu0 %v343
        %350 = vmatprep.subr.bf16.mxu0 0
        %351 = vmatpush1.bf16.msra.mxu0 0
        %352 = vmatprep.subr.bf16.mxu0 0
        %353 = vmatpush1.bf16.msra.mxu0 0
        %354 = vmatprep.subr.bf16.mxu0 0
        %355 = vmatpush1.bf16.msra.mxu0 0
        %356 = vmatprep.subr.bf16.mxu0 0
        %357 = vmatpush1.bf16.msra.mxu0 0
        %358 = vmatprep.subr.bf16.mxu0 0
        %359 = vmatpush1.bf16.msra.mxu0 0
        %360 = vmatprep.subr.bf16.mxu0 0
        %361 = vmatpush1.bf16.msra.mxu0 0
        %362 = vmatprep.subr.bf16.mxu0 0
        %363 = vmatpush1.bf16.msra.mxu0 0
        %364 = vmatprep.subr.bf16.mxu0 0
        %365 = vmatpush1.bf16.msra.mxu0 0
        %366 = vmatprep.subr.bf16.mxu0 0
        %367 = vmatpush1.bf16.msra.mxu0 0
        %368 = vmatprep.subr.bf16.mxu0 0
        %369 = vmatpush1.bf16.msra.mxu0 0
        %370 = vmatprep.subr.bf16.mxu0 0
        %371 = vmatpush1.bf16.msra.mxu0 0
        %372 = vmatprep.subr.bf16.mxu0 0
        %373 = vmatpush1.bf16.msra.mxu0 0
        %374 = vmatprep.subr.bf16.mxu0 0
        %375 = vmatpush1.bf16.msra.mxu0 0
        %376 = vmatprep.subr.bf16.mxu0 0
        %377 = vmatpush1.bf16.msra.mxu0 0
        %378 = vmatprep.subr.bf16.mxu0 0
        %379 = vmatpush1.bf16.msra.mxu0 0
        %380 = vmatprep.mubr.bf16.mxu0 0
        %381 = vmatmul.mubr.bf16.gmra.mrb[0].mxu0 %v339
        %v382 = vpop.f32.mrb[0].mxu0
        %v383 = vadd.f32 0.0, %v382
        %v384 = vpop.f32.mrb[0].mxu0
        %v385 = vadd.f32 0.0, %v384
        %v386 = vpop.f32.mrb[0].mxu0
        %v387 = vpop.f32.mrb[0].mxu0
        %388 = vdwg.mxu0
        %v389 = vsel %vm283, 1, 0
        %v390 = vsel %vm284, 1, 0
        %vm391 = vcmp.eq.s32.totalorder %v389, 1
        %vm392 = vcmp.eq.s32.totalorder %v390, 1
        %v393 = vsel %vm391, %v383, 0.0
        %v394 = vsel %vm392, %v385, 0.0
        %v395 = vadd.f32 %v393, 0.0
        %v396 = vadd.f32 %v394, 0.0
        %v397 = vld [vmem:[#allocation2] sm:$0x3f]
        %s398 = scalar_lea.vmem %s1, 2
        %v399 = vld [vmem:[%s398] sm:$0x3]
        %v401 = vcombine.high %v397, %v397
        %v403 = vunpack.c.l.s4 1983009808
        %v404 = vunpack.c.0.s8 %v403
        %v405 = vlaneseq
        %v406 = vshrl.u32 %v405, 7
        %v407 = vsub.s32 %v404, %v406
        %v408 = vrot.slane %v397, %v407
        %v410 = vunpack.c.l.s4 1983009808
        %v411 = vunpack.c.0.s8 %v410
        %v412 = vlaneseq
        %v413 = vshrl.u32 %v412, 7
        %v414 = vsub.s32 %v411, %v413
        %v415 = vrot.slane %v401, %v414
        %v416 = vcombine.high %v408, %v408
        %417 = vrot.lane.b32.xlu0 %v408, 16
        %v418 = vpop.permute.xlu0 %417
        %419 = vrot.lane.b32.xlu0 %v416, 16
        %v420 = vpop.permute.xlu0 %419
        %421 = vrot.lane.b32.xlu0 %v415, 16
        %v422 = vpop.permute.xlu0 %421
        %vm423 = vcmask 130048
        %v424 = vsel %vm423, %v418, %v420
        %v425 = vsel %vm423, %v420, %v422
        %v427 = vsel %vm337, %v399, 0
        %v430 = vsel %vm341, %v424, 0
        %v433 = vsel %vm341, %v425, 0
        %435 = vmatprep.subr.bf16.mxu0 %v433
        %436 = vmatpush1.bf16.msra.mxu0 %v430
        %437 = vmatprep.subr.bf16.mxu0 0
        %438 = vmatpush1.bf16.msra.mxu0 0
        %439 = vmatprep.subr.bf16.mxu0 0
        %440 = vmatpush1.bf16.msra.mxu0 0
        %441 = vmatprep.subr.bf16.mxu0 0
        %442 = vmatpush1.bf16.msra.mxu0 0
        %443 = vmatprep.subr.bf16.mxu0 0
        %444 = vmatpush1.bf16.msra.mxu0 0
        %445 = vmatprep.subr.bf16.mxu0 0
        %446 = vmatpush1.bf16.msra.mxu0 0
        %447 = vmatprep.subr.bf16.mxu0 0
        %448 = vmatpush1.bf16.msra.mxu0 0
        %449 = vmatprep.subr.bf16.mxu0 0
        %450 = vmatpush1.bf16.msra.mxu0 0
        %451 = vmatprep.subr.bf16.mxu0 0
        %452 = vmatpush1.bf16.msra.mxu0 0
        %453 = vmatprep.subr.bf16.mxu0 0
        %454 = vmatpush1.bf16.msra.mxu0 0
        %455 = vmatprep.subr.bf16.mxu0 0
        %456 = vmatpush1.bf16.msra.mxu0 0
        %457 = vmatprep.subr.bf16.mxu0 0
        %458 = vmatpush1.bf16.msra.mxu0 0
        %459 = vmatprep.subr.bf16.mxu0 0
        %460 = vmatpush1.bf16.msra.mxu0 0
        %461 = vmatprep.subr.bf16.mxu0 0
        %462 = vmatpush1.bf16.msra.mxu0 0
        %463 = vmatprep.subr.bf16.mxu0 0
        %464 = vmatpush1.bf16.msra.mxu0 0
        %465 = vmatprep.subr.bf16.mxu0 0
        %466 = vmatpush1.bf16.msra.mxu0 0
        %467 = vmatprep.mubr.bf16.mxu0 0
        %468 = vmatmul.mubr.bf16.gmra.mrb[0].mxu0 %v427
        %v469 = vpop.f32.mrb[0].mxu0
        %v470 = vadd.f32 0.0, %v469
        %v471 = vpop.f32.mrb[0].mxu0
        %v472 = vadd.f32 0.0, %v471
        %v473 = vpop.f32.mrb[0].mxu0
        %v474 = vpop.f32.mrb[0].mxu0
        %475 = vdwg.mxu0
        %v476 = vadd.f32 %v395, %v470
        %v477 = vadd.f32 %v396, %v472
        %v478 = vld [vmem:[#allocation2] sm:$0x3f]
        %s479 = scalar_lea.vmem %s1, 4
        %v480 = vld [vmem:[%s479] sm:$0x3]
        %v482 = vcombine.high %v478, %v478
        %v484 = vunpack.c.l.s4 1983009808
        %v485 = vunpack.c.0.s8 %v484
        %v486 = vlaneseq
        %v487 = vshrl.u32 %v486, 7
        %v488 = vsub.s32 %v485, %v487
        %v489 = vrot.slane %v478, %v488
        %v491 = vunpack.c.l.s4 1983009808
        %v492 = vunpack.c.0.s8 %v491
        %v493 = vlaneseq
        %v494 = vshrl.u32 %v493, 7
        %v495 = vsub.s32 %v492, %v494
        %v496 = vrot.slane %v482, %v495
        %v497 = vcombine.high %v489, %v489
        %498 = vrot.lane.b32.xlu0 %v489, 15
        %v499 = vpop.permute.xlu0 %498
        %500 = vrot.lane.b32.xlu0 %v497, 15
        %v501 = vpop.permute.xlu0 %500
        %502 = vrot.lane.b32.xlu0 %v496, 15
        %v503 = vpop.permute.xlu0 %502
        %vm504 = vcmask 121856
        %v505 = vsel %vm504, %v499, %v501
        %v506 = vsel %vm504, %v501, %v503
        %v508 = vsel %vm337, %v480, 0
        %v511 = vsel %vm341, %v505, 0
        %v514 = vsel %vm341, %v506, 0
        %516 = vmatprep.subr.bf16.mxu0 %v514
        %517 = vmatpush1.bf16.msra.mxu0 %v511
        %518 = vmatprep.subr.bf16.mxu0 0
        %519 = vmatpush1.bf16.msra.mxu0 0
        %520 = vmatprep.subr.bf16.mxu0 0
        %521 = vmatpush1.bf16.msra.mxu0 0
        %522 = vmatprep.subr.bf16.mxu0 0
        %523 = vmatpush1.bf16.msra.mxu0 0
        %524 = vmatprep.subr.bf16.mxu0 0
        %525 = vmatpush1.bf16.msra.mxu0 0
        %526 = vmatprep.subr.bf16.mxu0 0
        %527 = vmatpush1.bf16.msra.mxu0 0
        %528 = vmatprep.subr.bf16.mxu0 0
        %529 = vmatpush1.bf16.msra.mxu0 0
        %530 = vmatprep.subr.bf16.mxu0 0
        %531 = vmatpush1.bf16.msra.mxu0 0
        %532 = vmatprep.subr.bf16.mxu0 0
        %533 = vmatpush1.bf16.msra.mxu0 0
        %534 = vmatprep.subr.bf16.mxu0 0
        %535 = vmatpush1.bf16.msra.mxu0 0
        %536 = vmatprep.subr.bf16.mxu0 0
        %537 = vmatpush1.bf16.msra.mxu0 0
        %538 = vmatprep.subr.bf16.mxu0 0
        %539 = vmatpush1.bf16.msra.mxu0 0
        %540 = vmatprep.subr.bf16.mxu0 0
        %541 = vmatpush1.bf16.msra.mxu0 0
        %542 = vmatprep.subr.bf16.mxu0 0
        %543 = vmatpush1.bf16.msra.mxu0 0
        %544 = vmatprep.subr.bf16.mxu0 0
        %545 = vmatpush1.bf16.msra.mxu0 0
        %546 = vmatprep.subr.bf16.mxu0 0
        %547 = vmatpush1.bf16.msra.mxu0 0
        %548 = vmatprep.mubr.bf16.mxu0 0
        %549 = vmatmul.mubr.bf16.gmra.mrb[0].mxu0 %v508
        %v550 = vpop.f32.mrb[0].mxu0
        %v551 = vadd.f32 0.0, %v550
        %v552 = vpop.f32.mrb[0].mxu0
        %v553 = vadd.f32 0.0, %v552
        %v554 = vpop.f32.mrb[0].mxu0
        %v555 = vpop.f32.mrb[0].mxu0
        %556 = vdwg.mxu0
        %v557 = vsel %vm285, 1, 0
        %v558 = vsel %vm286, 1, 0
        %vm559 = vcmp.eq.s32.totalorder %v557, 1
        %vm560 = vcmp.eq.s32.totalorder %v558, 1
        %v561 = vsel %vm559, %v551, 0.0
        %v562 = vsel %vm560, %v553, 0.0
        %v563 = vadd.f32 %v476, %v561
        %v564 = vadd.f32 %v477, %v562
        %v565 = vld [vmem:[#allocation2] sm:$0x3f]
        %s566 = scalar_lea.vmem %s1, 6
        %v567 = vld [vmem:[%s566] sm:$0x3]
        %v569 = vcombine.high %v565, %v565
        %v571 = vunpack.c.l.s4 1983009808
        %v572 = vunpack.c.0.s8 %v571
        %v573 = vlaneseq
        %v574 = vshrl.u32 %v573, 7
        %v575 = vsub.s32 %v572, %v574
        %v576 = vrot.slane %v565, %v575
        %v578 = vunpack.c.l.s4 1983009808
        %v579 = vunpack.c.0.s8 %v578
        %v580 = vlaneseq
        %v581 = vshrl.u32 %v580, 7
        %v582 = vsub.s32 %v579, %v581
        %v583 = vrot.slane %v569, %v582
        %v584 = vcombine.high %v576, %v576
        %585 = vrot.lane.b32.xlu0 %v576, 1
        %v586 = vpop.permute.xlu0 %585
        %587 = vrot.lane.b32.xlu0 %v584, 1
        %v588 = vpop.permute.xlu0 %587
        %589 = vrot.lane.b32.xlu0 %v583, 1
        %v590 = vpop.permute.xlu0 %589
        %vm591 = vcmask 7168
        %v592 = vsel %vm591, %v586, %v588
        %v593 = vsel %vm591, %v588, %v590
        %v595 = vsel %vm337, %v567, 0
        %v598 = vsel %vm341, %v592, 0
        %v601 = vsel %vm341, %v593, 0
        %603 = vmatprep.subr.bf16.mxu0 %v601
        %604 = vmatpush1.bf16.msra.mxu0 %v598
        %605 = vmatprep.subr.bf16.mxu0 0
        %606 = vmatpush1.bf16.msra.mxu0 0
        %607 = vmatprep.subr.bf16.mxu0 0
        %608 = vmatpush1.bf16.msra.mxu0 0
        %609 = vmatprep.subr.bf16.mxu0 0
        %610 = vmatpush1.bf16.msra.mxu0 0
        %611 = vmatprep.subr.bf16.mxu0 0
        %612 = vmatpush1.bf16.msra.mxu0 0
        %613 = vmatprep.subr.bf16.mxu0 0
        %614 = vmatpush1.bf16.msra.mxu0 0
        %615 = vmatprep.subr.bf16.mxu0 0
        %616 = vmatpush1.bf16.msra.mxu0 0
        %617 = vmatprep.subr.bf16.mxu0 0
        %618 = vmatpush1.bf16.msra.mxu0 0
        %619 = vmatprep.subr.bf16.mxu0 0
        %620 = vmatpush1.bf16.msra.mxu0 0
        %621 = vmatprep.subr.bf16.mxu0 0
        %622 = vmatpush1.bf16.msra.mxu0 0
        %623 = vmatprep.subr.bf16.mxu0 0
        %624 = vmatpush1.bf16.msra.mxu0 0
        %625 = vmatprep.subr.bf16.mxu0 0
        %626 = vmatpush1.bf16.msra.mxu0 0
        %627 = vmatprep.subr.bf16.mxu0 0
        %628 = vmatpush1.bf16.msra.mxu0 0
        %629 = vmatprep.subr.bf16.mxu0 0
        %630 = vmatpush1.bf16.msra.mxu0 0
        %631 = vmatprep.subr.bf16.mxu0 0
        %632 = vmatpush1.bf16.msra.mxu0 0
        %633 = vmatprep.subr.bf16.mxu0 0
        %634 = vmatpush1.bf16.msra.mxu0 0
        %635 = vmatprep.mubr.bf16.mxu0 0
        %636 = vmatmul.mubr.bf16.gmra.mrb[0].mxu0 %v595
        %v637 = vpop.f32.mrb[0].mxu0
        %v638 = vadd.f32 0.0, %v637
        %v639 = vpop.f32.mrb[0].mxu0
        %v640 = vadd.f32 0.0, %v639
        %v641 = vpop.f32.mrb[0].mxu0
        %v642 = vpop.f32.mrb[0].mxu0
        %643 = vdwg.mxu0
        %v644 = vsel %vm391, %v638, 0.0
        %v645 = vsel %vm392, %v640, 0.0
        %v646 = vadd.f32 %v563, %v644
        %v647 = vadd.f32 %v564, %v645
        %v648 = vld [vmem:[#allocation2 + $0x2] sm:$0xf]
        %s649 = scalar_lea.vmem %s1, 8
        %v650 = vld [vmem:[%s649] sm:$0x3]
        %v653 = vunpack.c.l.s4 1983009808
        %v654 = vunpack.c.0.s8 %v653
        %v655 = vlaneseq
        %v656 = vshrl.u32 %v655, 7
        %v657 = vsub.s32 %v654, %v656
        %v658 = vrot.slane %v648, %v657
        %v659 = vcombine.high %v658, %v658
        %v661 = vsel %vm337, %v650, 0
        %v664 = vsel %vm341, %v658, 0
        %v667 = vsel %vm341, %v659, 0
        %669 = vmatprep.subr.bf16.mxu0 %v667
        %670 = vmatpush1.bf16.msra.mxu0 %v664
        %671 = vmatprep.subr.bf16.mxu0 0
        %672 = vmatpush1.bf16.msra.mxu0 0
        %673 = vmatprep.subr.bf16.mxu0 0
        %674 = vmatpush1.bf16.msra.mxu0 0
        %675 = vmatprep.subr.bf16.mxu0 0
        %676 = vmatpush1.bf16.msra.mxu0 0
        %677 = vmatprep.subr.bf16.mxu0 0
        %678 = vmatpush1.bf16.msra.mxu0 0
        %679 = vmatprep.subr.bf16.mxu0 0
        %680 = vmatpush1.bf16.msra.mxu0 0
        %681 = vmatprep.subr.bf16.mxu0 0
        %682 = vmatpush1.bf16.msra.mxu0 0
        %683 = vmatprep.subr.bf16.mxu0 0
        %684 = vmatpush1.bf16.msra.mxu0 0
        %685 = vmatprep.subr.bf16.mxu0 0
        %686 = vmatpush1.bf16.msra.mxu0 0
        %687 = vmatprep.subr.bf16.mxu0 0
        %688 = vmatpush1.bf16.msra.mxu0 0
        %689 = vmatprep.subr.bf16.mxu0 0
        %690 = vmatpush1.bf16.msra.mxu0 0
        %691 = vmatprep.subr.bf16.mxu0 0
        %692 = vmatpush1.bf16.msra.mxu0 0
        %693 = vmatprep.subr.bf16.mxu0 0
        %694 = vmatpush1.bf16.msra.mxu0 0
        %695 = vmatprep.subr.bf16.mxu0 0
        %696 = vmatpush1.bf16.msra.mxu0 0
        %697 = vmatprep.subr.bf16.mxu0 0
        %698 = vmatpush1.bf16.msra.mxu0 0
        %699 = vmatprep.subr.bf16.mxu0 0
        %700 = vmatpush1.bf16.msra.mxu0 0
        %701 = vmatprep.mubr.bf16.mxu0 0
        %702 = vmatmul.mubr.bf16.gmra.mrb[0].mxu0 %v661
        %v703 = vpop.f32.mrb[0].mxu0
        %v704 = vadd.f32 0.0, %v703
        %v705 = vpop.f32.mrb[0].mxu0
        %v706 = vadd.f32 0.0, %v705
        %v707 = vpop.f32.mrb[0].mxu0
        %v708 = vpop.f32.mrb[0].mxu0
        %709 = vdwg.mxu0
        %v710 = vadd.f32 %v646, %v704
        %v711 = vadd.f32 %v647, %v706
        %v712 = vld [vmem:[#allocation2 + $0x2] sm:$0x3f]
        %s713 = scalar_lea.vmem %s1, 10
        %v714 = vld [vmem:[%s713] sm:$0x3]
        %v716 = vcombine.high %v712, %v712
        %v718 = vunpack.c.l.s4 1983009808
        %v719 = vunpack.c.0.s8 %v718
        %v720 = vlaneseq
        %v721 = vshrl.u32 %v720, 7
        %v722 = vsub.s32 %v719, %v721
        %v723 = vrot.slane %v712, %v722
        %v725 = vunpack.c.l.s4 1983009808
        %v726 = vunpack.c.0.s8 %v725
        %v727 = vlaneseq
        %v728 = vshrl.u32 %v727, 7
        %v729 = vsub.s32 %v726, %v728
        %v730 = vrot.slane %v716, %v729
        %v731 = vcombine.high %v723, %v723
        %732 = vrot.lane.b32.xlu0 %v723, 127
        %v733 = vpop.permute.xlu0 %732
        %734 = vrot.lane.b32.xlu0 %v731, 127
        %v735 = vpop.permute.xlu0 %734
        %736 = vrot.lane.b32.xlu0 %v730, 127
        %v737 = vpop.permute.xlu0 %736
        %vm738 = vcmask 1039360
        %v739 = vsel %vm738, %v733, %v735
        %v740 = vsel %vm738, %v735, %v737
        %v742 = vsel %vm337, %v714, 0
        %v745 = vsel %vm341, %v739, 0
        %v748 = vsel %vm341, %v740, 0
        %750 = vmatprep.subr.bf16.mxu0 %v748
        %751 = vmatpush1.bf16.msra.mxu0 %v745
        %752 = vmatprep.subr.bf16.mxu0 0
        %753 = vmatpush1.bf16.msra.mxu0 0
        %754 = vmatprep.subr.bf16.mxu0 0
        %755 = vmatpush1.bf16.msra.mxu0 0
        %756 = vmatprep.subr.bf16.mxu0 0
        %757 = vmatpush1.bf16.msra.mxu0 0
        %758 = vmatprep.subr.bf16.mxu0 0
        %759 = vmatpush1.bf16.msra.mxu0 0
        %760 = vmatprep.subr.bf16.mxu0 0
        %761 = vmatpush1.bf16.msra.mxu0 0
        %762 = vmatprep.subr.bf16.mxu0 0
        %763 = vmatpush1.bf16.msra.mxu0 0
        %764 = vmatprep.subr.bf16.mxu0 0
        %765 = vmatpush1.bf16.msra.mxu0 0
        %766 = vmatprep.subr.bf16.mxu0 0
        %767 = vmatpush1.bf16.msra.mxu0 0
        %768 = vmatprep.subr.bf16.mxu0 0
        %769 = vmatpush1.bf16.msra.mxu0 0
        %770 = vmatprep.subr.bf16.mxu0 0
        %771 = vmatpush1.bf16.msra.mxu0 0
        %772 = vmatprep.subr.bf16.mxu0 0
        %773 = vmatpush1.bf16.msra.mxu0 0
        %774 = vmatprep.subr.bf16.mxu0 0
        %775 = vmatpush1.bf16.msra.mxu0 0
        %776 = vmatprep.subr.bf16.mxu0 0
        %777 = vmatpush1.bf16.msra.mxu0 0
        %778 = vmatprep.subr.bf16.mxu0 0
        %779 = vmatpush1.bf16.msra.mxu0 0
        %780 = vmatprep.subr.bf16.mxu0 0
        %781 = vmatpush1.bf16.msra.mxu0 0
        %782 = vmatprep.mubr.bf16.mxu0 0
        %783 = vmatmul.mubr.bf16.gmra.mrb[0].mxu0 %v742
        %v784 = vpop.f32.mrb[0].mxu0
        %v785 = vadd.f32 0.0, %v784
        %v786 = vpop.f32.mrb[0].mxu0
        %v787 = vadd.f32 0.0, %v786
        %v788 = vpop.f32.mrb[0].mxu0
        %v789 = vpop.f32.mrb[0].mxu0
        %790 = vdwg.mxu0
        %v791 = vsel %vm559, %v785, 0.0
        %v792 = vsel %vm560, %v787, 0.0
        %v793 = vadd.f32 %v710, %v791
        %v794 = vadd.f32 %v711, %v792
        %v795 = vld [vmem:[#allocation2 + $0x2] sm:$0x3f]
        %s796 = scalar_lea.vmem %s1, 12
        %v797 = vld [vmem:[%s796] sm:$0x3]
        %v799 = vcombine.high %v795, %v795
        %v801 = vunpack.c.l.s4 1983009808
        %v802 = vunpack.c.0.s8 %v801
        %v803 = vlaneseq
        %v804 = vshrl.u32 %v803, 7
        %v805 = vsub.s32 %v802, %v804
        %v806 = vrot.slane %v795, %v805
        %v808 = vunpack.c.l.s4 1983009808
        %v809 = vunpack.c.0.s8 %v808
        %v810 = vlaneseq
        %v811 = vshrl.u32 %v810, 7
        %v812 = vsub.s32 %v809, %v811
        %v813 = vrot.slane %v799, %v812
        %v814 = vcombine.high %v806, %v806
        %815 = vrot.lane.b32.xlu0 %v806, 113
        %v816 = vpop.permute.xlu0 %815
        %817 = vrot.lane.b32.xlu0 %v814, 113
        %v818 = vpop.permute.xlu0 %817
        %819 = vrot.lane.b32.xlu0 %v813, 113
        %v820 = vpop.permute.xlu0 %819
        %vm821 = vcmask 924672
        %v822 = vsel %vm821, %v816, %v818
        %v823 = vsel %vm821, %v818, %v820
        %v825 = vsel %vm337, %v797, 0
        %v828 = vsel %vm341, %v822, 0
        %v831 = vsel %vm341, %v823, 0
        %833 = vmatprep.subr.bf16.mxu0 %v831
        %834 = vmatpush1.bf16.msra.mxu0 %v828
        %835 = vmatprep.subr.bf16.mxu0 0
        %836 = vmatpush1.bf16.msra.mxu0 0
        %837 = vmatprep.subr.bf16.mxu0 0
        %838 = vmatpush1.bf16.msra.mxu0 0
        %839 = vmatprep.subr.bf16.mxu0 0
        %840 = vmatpush1.bf16.msra.mxu0 0
        %841 = vmatprep.subr.bf16.mxu0 0
        %842 = vmatpush1.bf16.msra.mxu0 0
        %843 = vmatprep.subr.bf16.mxu0 0
        %844 = vmatpush1.bf16.msra.mxu0 0
        %845 = vmatprep.subr.bf16.mxu0 0
        %846 = vmatpush1.bf16.msra.mxu0 0
        %847 = vmatprep.subr.bf16.mxu0 0
        %848 = vmatpush1.bf16.msra.mxu0 0
        %849 = vmatprep.subr.bf16.mxu0 0
        %850 = vmatpush1.bf16.msra.mxu0 0
        %851 = vmatprep.subr.bf16.mxu0 0
        %852 = vmatpush1.bf16.msra.mxu0 0
        %853 = vmatprep.subr.bf16.mxu0 0
        %854 = vmatpush1.bf16.msra.mxu0 0
        %855 = vmatprep.subr.bf16.mxu0 0
        %856 = vmatpush1.bf16.msra.mxu0 0
        %857 = vmatprep.subr.bf16.mxu0 0
        %858 = vmatpush1.bf16.msra.mxu0 0
        %859 = vmatprep.subr.bf16.mxu0 0
        %860 = vmatpush1.bf16.msra.mxu0 0
        %861 = vmatprep.subr.bf16.mxu0 0
        %862 = vmatpush1.bf16.msra.mxu0 0
        %863 = vmatprep.subr.bf16.mxu0 0
        %864 = vmatpush1.bf16.msra.mxu0 0
        %865 = vmatprep.mubr.bf16.mxu0 0
        %866 = vmatmul.mubr.bf16.gmra.mrb[0].mxu0 %v825
        %v867 = vpop.f32.mrb[0].mxu0
        %v868 = vadd.f32 0.0, %v867
        %v869 = vpop.f32.mrb[0].mxu0
        %v870 = vadd.f32 0.0, %v869
        %v871 = vpop.f32.mrb[0].mxu0
        %v872 = vpop.f32.mrb[0].mxu0
        %873 = vdwg.mxu0
        %v874 = vsel %vm391, %v868, 0.0
        %v875 = vsel %vm392, %v870, 0.0
        %v876 = vadd.f32 %v793, %v874
        %v877 = vadd.f32 %v794, %v875
        %v878 = vld [vmem:[#allocation2 + $0x2] sm:$0x3f]
        %s879 = scalar_lea.vmem %s1, 14
        %v880 = vld [vmem:[%s879] sm:$0x3]
        %v882 = vcombine.high %v878, %v878
        %v884 = vunpack.c.l.s4 1983009808
        %v885 = vunpack.c.0.s8 %v884
        %v886 = vlaneseq
        %v887 = vshrl.u32 %v886, 7
        %v888 = vsub.s32 %v885, %v887
        %v889 = vrot.slane %v878, %v888
        %v891 = vunpack.c.l.s4 1983009808
        %v892 = vunpack.c.0.s8 %v891
        %v893 = vlaneseq
        %v894 = vshrl.u32 %v893, 7
        %v895 = vsub.s32 %v892, %v894
        %v896 = vrot.slane %v882, %v895
        %v897 = vcombine.high %v889, %v889
        %898 = vrot.lane.b32.xlu0 %v889, 112
        %v899 = vpop.permute.xlu0 %898
        %900 = vrot.lane.b32.xlu0 %v897, 112
        %v901 = vpop.permute.xlu0 %900
        %902 = vrot.lane.b32.xlu0 %v896, 112
        %v903 = vpop.permute.xlu0 %902
        %vm904 = vcmask 916480
        %v905 = vsel %vm904, %v899, %v901
        %v906 = vsel %vm904, %v901, %v903
        %v908 = vsel %vm337, %v880, 0
        %v911 = vsel %vm341, %v905, 0
        %v914 = vsel %vm341, %v906, 0
        %916 = vmatprep.subr.bf16.mxu0 %v914
        %917 = vmatpush1.bf16.msra.mxu0 %v911
        %918 = vmatprep.subr.bf16.mxu0 0
        %919 = vmatpush1.bf16.msra.mxu0 0
        %920 = vmatprep.subr.bf16.mxu0 0
        %921 = vmatpush1.bf16.msra.mxu0 0
        %922 = vmatprep.subr.bf16.mxu0 0
        %923 = vmatpush1.bf16.msra.mxu0 0
        %924 = vmatprep.subr.bf16.mxu0 0
        %925 = vmatpush1.bf16.msra.mxu0 0
        %926 = vmatprep.subr.bf16.mxu0 0
        %927 = vmatpush1.bf16.msra.mxu0 0
        %928 = vmatprep.subr.bf16.mxu0 0
        %929 = vmatpush1.bf16.msra.mxu0 0
        %930 = vmatprep.subr.bf16.mxu0 0
        %931 = vmatpush1.bf16.msra.mxu0 0
        %932 = vmatprep.subr.bf16.mxu0 0
        %933 = vmatpush1.bf16.msra.mxu0 0
        %934 = vmatprep.subr.bf16.mxu0 0
        %935 = vmatpush1.bf16.msra.mxu0 0
        %936 = vmatprep.subr.bf16.mxu0 0
        %937 = vmatpush1.bf16.msra.mxu0 0
        %938 = vmatprep.subr.bf16.mxu0 0
        %939 = vmatpush1.bf16.msra.mxu0 0
        %940 = vmatprep.subr.bf16.mxu0 0
        %941 = vmatpush1.bf16.msra.mxu0 0
        %942 = vmatprep.subr.bf16.mxu0 0
        %943 = vmatpush1.bf16.msra.mxu0 0
        %944 = vmatprep.subr.bf16.mxu0 0
        %945 = vmatpush1.bf16.msra.mxu0 0
        %946 = vmatprep.subr.bf16.mxu0 0
        %947 = vmatpush1.bf16.msra.mxu0 0
        %948 = vmatprep.mubr.bf16.mxu0 0
        %949 = vmatmul.mubr.bf16.gmra.mrb[0].mxu0 %v908
        %v950 = vpop.f32.mrb[0].mxu0
        %v951 = vadd.f32 0.0, %v950
        %v952 = vpop.f32.mrb[0].mxu0
        %v953 = vadd.f32 0.0, %v952
        %v954 = vpop.f32.mrb[0].mxu0
        %v955 = vpop.f32.mrb[0].mxu0
        %956 = vdwg.mxu0
        %v957 = vadd.f32 %v876, %v951
        %v958 = vadd.f32 %v877, %v953
        %v959 = vld [vmem:[#allocation2 + $0x2] sm:$0x3f]
        %s960 = scalar_lea.vmem %s1, 16
        %v961 = vld [vmem:[%s960] sm:$0x3]
        %v963 = vcombine.high %v959, %v959
        %v965 = vunpack.c.l.s4 1983009808
        %v966 = vunpack.c.0.s8 %v965
        %v967 = vlaneseq
        %v968 = vshrl.u32 %v967, 7
        %v969 = vsub.s32 %v966, %v968
        %v970 = vrot.slane %v959, %v969
        %v972 = vunpack.c.l.s4 1983009808
        %v973 = vunpack.c.0.s8 %v972
        %v974 = vlaneseq
        %v975 = vshrl.u32 %v974, 7
        %v976 = vsub.s32 %v973, %v975
        %v977 = vrot.slane %v963, %v976
        %v978 = vcombine.high %v970, %v970
        %979 = vrot.lane.b32.xlu0 %v970, 111
        %v980 = vpop.permute.xlu0 %979
        %981 = vrot.lane.b32.xlu0 %v978, 111
        %v982 = vpop.permute.xlu0 %981
        %983 = vrot.lane.b32.xlu0 %v977, 111
        %v984 = vpop.permute.xlu0 %983
        %vm985 = vcmask 908288
        %v986 = vsel %vm985, %v980, %v982
        %v987 = vsel %vm985, %v982, %v984
        %v989 = vsel %vm337, %v961, 0
        %v992 = vsel %vm341, %v986, 0
        %v995 = vsel %vm341, %v987, 0
        %997 = vmatprep.subr.bf16.mxu0 %v995
        %998 = vmatpush1.bf16.msra.mxu0 %v992
        %999 = vmatprep.subr.bf16.mxu0 0
        %1000 = vmatpush1.bf16.msra.mxu0 0
        %1001 = vmatprep.subr.bf16.mxu0 0
        %1002 = vmatpush1.bf16.msra.mxu0 0
        %1003 = vmatprep.subr.bf16.mxu0 0
        %1004 = vmatpush1.bf16.msra.mxu0 0
        %1005 = vmatprep.subr.bf16.mxu0 0
        %1006 = vmatpush1.bf16.msra.mxu0 0
        %1007 = vmatprep.subr.bf16.mxu0 0
        %1008 = vmatpush1.bf16.msra.mxu0 0
        %1009 = vmatprep.subr.bf16.mxu0 0
        %1010 = vmatpush1.bf16.msra.mxu0 0
        %1011 = vmatprep.subr.bf16.mxu0 0
        %1012 = vmatpush1.bf16.msra.mxu0 0
        %1013 = vmatprep.subr.bf16.mxu0 0
        %1014 = vmatpush1.bf16.msra.mxu0 0
        %1015 = vmatprep.subr.bf16.mxu0 0
        %1016 = vmatpush1.bf16.msra.mxu0 0
        %1017 = vmatprep.subr.bf16.mxu0 0
        %1018 = vmatpush1.bf16.msra.mxu0 0
        %1019 = vmatprep.subr.bf16.mxu0 0
        %1020 = vmatpush1.bf16.msra.mxu0 0
        %1021 = vmatprep.subr.bf16.mxu0 0
        %1022 = vmatpush1.bf16.msra.mxu0 0
        %1023 = vmatprep.subr.bf16.mxu0 0
        %1024 = vmatpush1.bf16.msra.mxu0 0
        %1025 = vmatprep.subr.bf16.mxu0 0
        %1026 = vmatpush1.bf16.msra.mxu0 0
        %1027 = vmatprep.subr.bf16.mxu0 0
        %1028 = vmatpush1.bf16.msra.mxu0 0
        %1029 = vmatprep.mubr.bf16.mxu0 0
        %1030 = vmatmul.mubr.bf16.gmra.mrb[0].mxu0 %v989
        %v1031 = vpop.f32.mrb[0].mxu0
        %v1032 = vadd.f32 0.0, %v1031
        %v1033 = vpop.f32.mrb[0].mxu0
        %v1034 = vadd.f32 0.0, %v1033
        %v1035 = vpop.f32.mrb[0].mxu0
        %v1036 = vpop.f32.mrb[0].mxu0
        %1037 = vdwg.mxu0
        %v1038 = vsel %vm559, %v1032, 0.0
        %v1039 = vsel %vm560, %v1034, 0.0
        %v1040 = vadd.f32 %v957, %v1038
        %v1041 = vadd.f32 %v958, %v1039
        %v1042 = vld [vmem:[%s2] sm:$0xf]
        %1044 = vset.pattern.permute.xlu0 0
        %1045 = vperm.xlu0 %1044, %v1042
        %v1046 = vpop.permute.xlu0 %1045
        %v1048 = vadd.f32 %v1040, %v1046
        %v1049 = vadd.f32 %v1041, %v1046
        %v1050 = vmax.f32 %v1048, 0.0
        %v1051 = vmax.f32 %v1049, 0.0
        %v1052 = vpack.c.bf16 %v1050, %v1050
        %v1053 = vpack.c.bf16 %v1051, %v1051
        %v1056 = vcombine.low %v1052, %v1053
        %v1058 = vunpack.c.l.s4 1983009808
        %v1059 = vunpack.c.0.s8 %v1058
        %v1060 = vlaneseq
        %v1061 = vshrl.u32 %v1060, 7
        %v1062 = vsub.s32 %v1059, %v1061
        %v1063 = vrot.slane %v1056, %v1062
        %1065 = vst [vmem:[#allocation3 + $0x2] sm:$0xf] %v1063
        %v1066 = vld [vmem:[#allocation3] sm:$0x3f]
        %v1067 = vld [vmem:[%s3] sm:$0x3]
        %v1069 = vcombine.high %v1066, %v1066
        %v1071 = vunpack.c.l.s4 1983009808
        %v1072 = vunpack.c.0.s8 %v1071
        %v1073 = vlaneseq
        %v1074 = vshrl.u32 %v1073, 7
        %v1075 = vsub.s32 %v1072, %v1074
        %v1076 = vrot.slane %v1066, %v1075
        %v1078 = vunpack.c.l.s4 1983009808
        %v1079 = vunpack.c.0.s8 %v1078
        %v1080 = vlaneseq
        %v1081 = vshrl.u32 %v1080, 7
        %v1082 = vsub.s32 %v1079, %v1081
        %v1083 = vrot.slane %v1069, %v1082
        %v1084 = vcombine.high %v1076, %v1076
        %1085 = vrot.lane.b32.xlu0 %v1076, 17
        %v1086 = vpop.permute.xlu0 %1085
        %1087 = vrot.lane.b32.xlu0 %v1084, 17
        %v1088 = vpop.permute.xlu0 %1087
        %1089 = vrot.lane.b32.xlu0 %v1083, 17
        %v1090 = vpop.permute.xlu0 %1089
        %v1091 = vsel %vm334, %v1086, %v1088
        %v1092 = vsel %vm334, %v1088, %v1090
        %v1094 = vsel %vm337, %v1067, 0
        %v1097 = vsel %vm341, %v1091, 0
        %v1100 = vsel %vm341, %v1092, 0
        %1102 = vmatprep.subr.bf16.mxu0 %v1100
        %1103 = vmatpush1.bf16.msra.mxu0 %v1097
        %1104 = vmatprep.subr.bf16.mxu0 0
        %1105 = vmatpush1.bf16.msra.mxu0 0
        %1106 = vmatprep.subr.bf16.mxu0 0
        %1107 = vmatpush1.bf16.msra.mxu0 0
        %1108 = vmatprep.subr.bf16.mxu0 0
        %1109 = vmatpush1.bf16.msra.mxu0 0
        %1110 = vmatprep.subr.bf16.mxu0 0
        %1111 = vmatpush1.bf16.msra.mxu0 0
        %1112 = vmatprep.subr.bf16.mxu0 0
        %1113 = vmatpush1.bf16.msra.mxu0 0
        %1114 = vmatprep.subr.bf16.mxu0 0
        %1115 = vmatpush1.bf16.msra.mxu0 0
        %1116 = vmatprep.subr.bf16.mxu0 0
        %1117 = vmatpush1.bf16.msra.mxu0 0
        %1118 = vmatprep.subr.bf16.mxu0 0
        %1119 = vmatpush1.bf16.msra.mxu0 0
        %1120 = vmatprep.subr.bf16.mxu0 0
        %1121 = vmatpush1.bf16.msra.mxu0 0
        %1122 = vmatprep.subr.bf16.mxu0 0
        %1123 = vmatpush1.bf16.msra.mxu0 0
        %1124 = vmatprep.subr.bf16.mxu0 0
        %1125 = vmatpush1.bf16.msra.mxu0 0
        %1126 = vmatprep.subr.bf16.mxu0 0
        %1127 = vmatpush1.bf16.msra.mxu0 0
        %1128 = vmatprep.subr.bf16.mxu0 0
        %1129 = vmatpush1.bf16.msra.mxu0 0
        %1130 = vmatprep.subr.bf16.mxu0 0
        %1131 = vmatpush1.bf16.msra.mxu0 0
        %1132 = vmatprep.subr.bf16.mxu0 0
        %1133 = vmatpush1.bf16.msra.mxu0 0
        %1134 = vmatprep.mubr.bf16.mxu0 0
        %1135 = vmatmul.mubr.bf16.gmra.mrb[0].mxu0 %v1094
        %v1136 = vpop.f32.mrb[0].mxu0
        %v1137 = vadd.f32 0.0, %v1136
        %v1138 = vpop.f32.mrb[0].mxu0
        %v1139 = vadd.f32 0.0, %v1138
        %v1140 = vpop.f32.mrb[0].mxu0
        %v1141 = vpop.f32.mrb[0].mxu0
        %1142 = vdwg.mxu0
        %v1143 = vsel %vm391, %v1137, 0.0
        %v1144 = vsel %vm392, %v1139, 0.0
        %v1145 = vadd.f32 %v1143, 0.0
        %v1146 = vadd.f32 %v1144, 0.0
        %v1147 = vld [vmem:[#allocation3] sm:$0x3f]
        %s1148 = scalar_lea.vmem %s3, 2
        %v1149 = vld [vmem:[%s1148] sm:$0x3]
        %v1151 = vcombine.high %v1147, %v1147
        %v1153 = vunpack.c.l.s4 1983009808
        %v1154 = vunpack.c.0.s8 %v1153
        %v1155 = vlaneseq
        %v1156 = vshrl.u32 %v1155, 7
        %v1157 = vsub.s32 %v1154, %v1156
        %v1158 = vrot.slane %v1147, %v1157
        %v1160 = vunpack.c.l.s4 1983009808
        %v1161 = vunpack.c.0.s8 %v1160
        %v1162 = vlaneseq
        %v1163 = vshrl.u32 %v1162, 7
        %v1164 = vsub.s32 %v1161, %v1163
        %v1165 = vrot.slane %v1151, %v1164
        %v1166 = vcombine.high %v1158, %v1158
        %1167 = vrot.lane.b32.xlu0 %v1158, 16
        %v1168 = vpop.permute.xlu0 %1167
        %1169 = vrot.lane.b32.xlu0 %v1166, 16
        %v1170 = vpop.permute.xlu0 %1169
        %1171 = vrot.lane.b32.xlu0 %v1165, 16
        %v1172 = vpop.permute.xlu0 %1171
        %v1173 = vsel %vm423, %v1168, %v1170
        %v1174 = vsel %vm423, %v1170, %v1172
        %v1176 = vsel %vm337, %v1149, 0
        %v1179 = vsel %vm341, %v1173, 0
        %v1182 = vsel %vm341, %v1174, 0
        %1184 = vmatprep.subr.bf16.mxu0 %v1182
        %1185 = vmatpush1.bf16.msra.mxu0 %v1179
        %1186 = vmatprep.subr.bf16.mxu0 0
        %1187 = vmatpush1.bf16.msra.mxu0 0
        %1188 = vmatprep.subr.bf16.mxu0 0
        %1189 = vmatpush1.bf16.msra.mxu0 0
        %1190 = vmatprep.subr.bf16.mxu0 0
        %1191 = vmatpush1.bf16.msra.mxu0 0
        %1192 = vmatprep.subr.bf16.mxu0 0
        %1193 = vmatpush1.bf16.msra.mxu0 0
        %1194 = vmatprep.subr.bf16.mxu0 0
        %1195 = vmatpush1.bf16.msra.mxu0 0
        %1196 = vmatprep.subr.bf16.mxu0 0
        %1197 = vmatpush1.bf16.msra.mxu0 0
        %1198 = vmatprep.subr.bf16.mxu0 0
        %1199 = vmatpush1.bf16.msra.mxu0 0
        %1200 = vmatprep.subr.bf16.mxu0 0
        %1201 = vmatpush1.bf16.msra.mxu0 0
        %1202 = vmatprep.subr.bf16.mxu0 0
        %1203 = vmatpush1.bf16.msra.mxu0 0
        %1204 = vmatprep.subr.bf16.mxu0 0
        %1205 = vmatpush1.bf16.msra.mxu0 0
        %1206 = vmatprep.subr.bf16.mxu0 0
        %1207 = vmatpush1.bf16.msra.mxu0 0
        %1208 = vmatprep.subr.bf16.mxu0 0
        %1209 = vmatpush1.bf16.msra.mxu0 0
        %1210 = vmatprep.subr.bf16.mxu0 0
        %1211 = vmatpush1.bf16.msra.mxu0 0
        %1212 = vmatprep.subr.bf16.mxu0 0
        %1213 = vmatpush1.bf16.msra.mxu0 0
        %1214 = vmatprep.subr.bf16.mxu0 0
        %1215 = vmatpush1.bf16.msra.mxu0 0
        %1216 = vmatprep.mubr.bf16.mxu0 0
        %1217 = vmatmul.mubr.bf16.gmra.mrb[0].mxu0 %v1176
        %v1218 = vpop.f32.mrb[0].mxu0
        %v1219 = vadd.f32 0.0, %v1218
        %v1220 = vpop.f32.mrb[0].mxu0
        %v1221 = vadd.f32 0.0, %v1220
        %v1222 = vpop.f32.mrb[0].mxu0
        %v1223 = vpop.f32.mrb[0].mxu0
        %1224 = vdwg.mxu0
        %v1225 = vadd.f32 %v1145, %v1219
        %v1226 = vadd.f32 %v1146, %v1221
        %v1227 = vld [vmem:[#allocation3] sm:$0x3f]
        %s1228 = scalar_lea.vmem %s3, 4
        %v1229 = vld [vmem:[%s1228] sm:$0x3]
        %v1231 = vcombine.high %v1227, %v1227
        %v1233 = vunpack.c.l.s4 1983009808
        %v1234 = vunpack.c.0.s8 %v1233
        %v1235 = vlaneseq
        %v1236 = vshrl.u32 %v1235, 7
        %v1237 = vsub.s32 %v1234, %v1236
        %v1238 = vrot.slane %v1227, %v1237
        %v1240 = vunpack.c.l.s4 1983009808
        %v1241 = vunpack.c.0.s8 %v1240
        %v1242 = vlaneseq
        %v1243 = vshrl.u32 %v1242, 7
        %v1244 = vsub.s32 %v1241, %v1243
        %v1245 = vrot.slane %v1231, %v1244
        %v1246 = vcombine.high %v1238, %v1238
        %1247 = vrot.lane.b32.xlu0 %v1238, 15
        %v1248 = vpop.permute.xlu0 %1247
        %1249 = vrot.lane.b32.xlu0 %v1246, 15
        %v1250 = vpop.permute.xlu0 %1249
        %1251 = vrot.lane.b32.xlu0 %v1245, 15
        %v1252 = vpop.permute.xlu0 %1251
        %v1253 = vsel %vm504, %v1248, %v1250
        %v1254 = vsel %vm504, %v1250, %v1252
        %v1256 = vsel %vm337, %v1229, 0
        %v1259 = vsel %vm341, %v1253, 0
        %v1262 = vsel %vm341, %v1254, 0
        %1264 = vmatprep.subr.bf16.mxu0 %v1262
        %1265 = vmatpush1.bf16.msra.mxu0 %v1259
        %1266 = vmatprep.subr.bf16.mxu0 0
        %1267 = vmatpush1.bf16.msra.mxu0 0
        %1268 = vmatprep.subr.bf16.mxu0 0
        %1269 = vmatpush1.bf16.msra.mxu0 0
        %1270 = vmatprep.subr.bf16.mxu0 0
        %1271 = vmatpush1.bf16.msra.mxu0 0
        %1272 = vmatprep.subr.bf16.mxu0 0
        %1273 = vmatpush1.bf16.msra.mxu0 0
        %1274 = vmatprep.subr.bf16.mxu0 0
        %1275 = vmatpush1.bf16.msra.mxu0 0
        %1276 = vmatprep.subr.bf16.mxu0 0
        %1277 = vmatpush1.bf16.msra.mxu0 0
        %1278 = vmatprep.subr.bf16.mxu0 0
        %1279 = vmatpush1.bf16.msra.mxu0 0
        %1280 = vmatprep.subr.bf16.mxu0 0
        %1281 = vmatpush1.bf16.msra.mxu0 0
        %1282 = vmatprep.subr.bf16.mxu0 0
        %1283 = vmatpush1.bf16.msra.mxu0 0
        %1284 = vmatprep.subr.bf16.mxu0 0
        %1285 = vmatpush1.bf16.msra.mxu0 0
        %1286 = vmatprep.subr.bf16.mxu0 0
        %1287 = vmatpush1.bf16.msra.mxu0 0
        %1288 = vmatprep.subr.bf16.mxu0 0
        %1289 = vmatpush1.bf16.msra.mxu0 0
        %1290 = vmatprep.subr.bf16.mxu0 0
        %1291 = vmatpush1.bf16.msra.mxu0 0
        %1292 = vmatprep.subr.bf16.mxu0 0
        %1293 = vmatpush1.bf16.msra.mxu0 0
        %1294 = vmatprep.subr.bf16.mxu0 0
        %1295 = vmatpush1.bf16.msra.mxu0 0
        %1296 = vmatprep.mubr.bf16.mxu0 0
        %1297 = vmatmul.mubr.bf16.gmra.mrb[0].mxu0 %v1256
        %v1298 = vpop.f32.mrb[0].mxu0
        %v1299 = vadd.f32 0.0, %v1298
        %v1300 = vpop.f32.mrb[0].mxu0
        %v1301 = vadd.f32 0.0, %v1300
        %v1302 = vpop.f32.mrb[0].mxu0
        %v1303 = vpop.f32.mrb[0].mxu0
        %1304 = vdwg.mxu0
        %v1305 = vsel %vm559, %v1299, 0.0
        %v1306 = vsel %vm560, %v1301, 0.0
        %v1307 = vadd.f32 %v1225, %v1305
        %v1308 = vadd.f32 %v1226, %v1306
        %v1309 = vld [vmem:[#allocation3] sm:$0x3f]
        %s1310 = scalar_lea.vmem %s3, 6
        %v1311 = vld [vmem:[%s1310] sm:$0x3]
        %v1313 = vcombine.high %v1309, %v1309
        %v1315 = vunpack.c.l.s4 1983009808
        %v1316 = vunpack.c.0.s8 %v1315
        %v1317 = vlaneseq
        %v1318 = vshrl.u32 %v1317, 7
        %v1319 = vsub.s32 %v1316, %v1318
        %v1320 = vrot.slane %v1309, %v1319
        %v1322 = vunpack.c.l.s4 1983009808
        %v1323 = vunpack.c.0.s8 %v1322
        %v1324 = vlaneseq
        %v1325 = vshrl.u32 %v1324, 7
        %v1326 = vsub.s32 %v1323, %v1325
        %v1327 = vrot.slane %v1313, %v1326
        %v1328 = vcombine.high %v1320, %v1320
        %1329 = vrot.lane.b32.xlu0 %v1320, 1
        %v1330 = vpop.permute.xlu0 %1329
        %1331 = vrot.lane.b32.xlu0 %v1328, 1
        %v1332 = vpop.permute.xlu0 %1331
        %1333 = vrot.lane.b32.xlu0 %v1327, 1
        %v1334 = vpop.permute.xlu0 %1333
        %v1335 = vsel %vm591, %v1330, %v1332
        %v1336 = vsel %vm591, %v1332, %v1334
        %v1338 = vsel %vm337, %v1311, 0
        %v1341 = vsel %vm341, %v1335, 0
        %v1344 = vsel %vm341, %v1336, 0
        %1346 = vmatprep.subr.bf16.mxu0 %v1344
        %1347 = vmatpush1.bf16.msra.mxu0 %v1341
        %1348 = vmatprep.subr.bf16.mxu0 0
        %1349 = vmatpush1.bf16.msra.mxu0 0
        %1350 = vmatprep.subr.bf16.mxu0 0
        %1351 = vmatpush1.bf16.msra.mxu0 0
        %1352 = vmatprep.subr.bf16.mxu0 0
        %1353 = vmatpush1.bf16.msra.mxu0 0
        %1354 = vmatprep.subr.bf16.mxu0 0
        %1355 = vmatpush1.bf16.msra.mxu0 0
        %1356 = vmatprep.subr.bf16.mxu0 0
        %1357 = vmatpush1.bf16.msra.mxu0 0
        %1358 = vmatprep.subr.bf16.mxu0 0
        %1359 = vmatpush1.bf16.msra.mxu0 0
        %1360 = vmatprep.subr.bf16.mxu0 0
        %1361 = vmatpush1.bf16.msra.mxu0 0
        %1362 = vmatprep.subr.bf16.mxu0 0
        %1363 = vmatpush1.bf16.msra.mxu0 0
        %1364 = vmatprep.subr.bf16.mxu0 0
        %1365 = vmatpush1.bf16.msra.mxu0 0
        %1366 = vmatprep.subr.bf16.mxu0 0
        %1367 = vmatpush1.bf16.msra.mxu0 0
        %1368 = vmatprep.subr.bf16.mxu0 0
        %1369 = vmatpush1.bf16.msra.mxu0 0
        %1370 = vmatprep.subr.bf16.mxu0 0
        %1371 = vmatpush1.bf16.msra.mxu0 0
        %1372 = vmatprep.subr.bf16.mxu0 0
        %1373 = vmatpush1.bf16.msra.mxu0 0
        %1374 = vmatprep.subr.bf16.mxu0 0
        %1375 = vmatpush1.bf16.msra.mxu0 0
        %1376 = vmatprep.subr.bf16.mxu0 0
        %1377 = vmatpush1.bf16.msra.mxu0 0
        %1378 = vmatprep.mubr.bf16.mxu0 0
        %1379 = vmatmul.mubr.bf16.gmra.mrb[0].mxu0 %v1338
        %v1380 = vpop.f32.mrb[0].mxu0
        %v1381 = vadd.f32 0.0, %v1380
        %v1382 = vpop.f32.mrb[0].mxu0
        %v1383 = vadd.f32 0.0, %v1382
        %v1384 = vpop.f32.mrb[0].mxu0
        %v1385 = vpop.f32.mrb[0].mxu0
        %1386 = vdwg.mxu0
        %v1387 = vsel %vm391, %v1381, 0.0
        %v1388 = vsel %vm392, %v1383, 0.0
        %v1389 = vadd.f32 %v1307, %v1387
        %v1390 = vadd.f32 %v1308, %v1388
        %v1391 = vld [vmem:[#allocation3 + $0x2] sm:$0xf]
        %s1392 = scalar_lea.vmem %s3, 8
        %v1393 = vld [vmem:[%s1392] sm:$0x3]
        %v1396 = vunpack.c.l.s4 1983009808
        %v1397 = vunpack.c.0.s8 %v1396
        %v1398 = vlaneseq
        %v1399 = vshrl.u32 %v1398, 7
        %v1400 = vsub.s32 %v1397, %v1399
        %v1401 = vrot.slane %v1391, %v1400
        %v1402 = vcombine.high %v1401, %v1401
        %v1404 = vsel %vm337, %v1393, 0
        %v1407 = vsel %vm341, %v1401, 0
        %v1410 = vsel %vm341, %v1402, 0
        %1412 = vmatprep.subr.bf16.mxu0 %v1410
        %1413 = vmatpush1.bf16.msra.mxu0 %v1407
        %1414 = vmatprep.subr.bf16.mxu0 0
        %1415 = vmatpush1.bf16.msra.mxu0 0
        %1416 = vmatprep.subr.bf16.mxu0 0
        %1417 = vmatpush1.bf16.msra.mxu0 0
        %1418 = vmatprep.subr.bf16.mxu0 0
        %1419 = vmatpush1.bf16.msra.mxu0 0
        %1420 = vmatprep.subr.bf16.mxu0 0
        %1421 = vmatpush1.bf16.msra.mxu0 0
        %1422 = vmatprep.subr.bf16.mxu0 0
        %1423 = vmatpush1.bf16.msra.mxu0 0
        %1424 = vmatprep.subr.bf16.mxu0 0
        %1425 = vmatpush1.bf16.msra.mxu0 0
        %1426 = vmatprep.subr.bf16.mxu0 0
        %1427 = vmatpush1.bf16.msra.mxu0 0
        %1428 = vmatprep.subr.bf16.mxu0 0
        %1429 = vmatpush1.bf16.msra.mxu0 0
        %1430 = vmatprep.subr.bf16.mxu0 0
        %1431 = vmatpush1.bf16.msra.mxu0 0
        %1432 = vmatprep.subr.bf16.mxu0 0
        %1433 = vmatpush1.bf16.msra.mxu0 0
        %1434 = vmatprep.subr.bf16.mxu0 0
        %1435 = vmatpush1.bf16.msra.mxu0 0
        %1436 = vmatprep.subr.bf16.mxu0 0
        %1437 = vmatpush1.bf16.msra.mxu0 0
        %1438 = vmatprep.subr.bf16.mxu0 0
        %1439 = vmatpush1.bf16.msra.mxu0 0
        %1440 = vmatprep.subr.bf16.mxu0 0
        %1441 = vmatpush1.bf16.msra.mxu0 0
        %1442 = vmatprep.subr.bf16.mxu0 0
        %1443 = vmatpush1.bf16.msra.mxu0 0
        %1444 = vmatprep.mubr.bf16.mxu0 0
        %1445 = vmatmul.mubr.bf16.gmra.mrb[0].mxu0 %v1404
        %v1446 = vpop.f32.mrb[0].mxu0
        %v1447 = vadd.f32 0.0, %v1446
        %v1448 = vpop.f32.mrb[0].mxu0
        %v1449 = vadd.f32 0.0, %v1448
        %v1450 = vpop.f32.mrb[0].mxu0
        %v1451 = vpop.f32.mrb[0].mxu0
        %1452 = vdwg.mxu0
        %v1453 = vadd.f32 %v1389, %v1447
        %v1454 = vadd.f32 %v1390, %v1449
        %v1455 = vld [vmem:[#allocation3 + $0x2] sm:$0x3f]
        %s1456 = scalar_lea.vmem %s3, 10
        %v1457 = vld [vmem:[%s1456] sm:$0x3]
        %v1459 = vcombine.high %v1455, %v1455
        %v1461 = vunpack.c.l.s4 1983009808
        %v1462 = vunpack.c.0.s8 %v1461
        %v1463 = vlaneseq
        %v1464 = vshrl.u32 %v1463, 7
        %v1465 = vsub.s32 %v1462, %v1464
        %v1466 = vrot.slane %v1455, %v1465
        %v1468 = vunpack.c.l.s4 1983009808
        %v1469 = vunpack.c.0.s8 %v1468
        %v1470 = vlaneseq
        %v1471 = vshrl.u32 %v1470, 7
        %v1472 = vsub.s32 %v1469, %v1471
        %v1473 = vrot.slane %v1459, %v1472
        %v1474 = vcombine.high %v1466, %v1466
        %1475 = vrot.lane.b32.xlu0 %v1466, 127
        %v1476 = vpop.permute.xlu0 %1475
        %1477 = vrot.lane.b32.xlu0 %v1474, 127
        %v1478 = vpop.permute.xlu0 %1477
        %1479 = vrot.lane.b32.xlu0 %v1473, 127
        %v1480 = vpop.permute.xlu0 %1479
        %v1481 = vsel %vm738, %v1476, %v1478
        %v1482 = vsel %vm738, %v1478, %v1480
        %v1484 = vsel %vm337, %v1457, 0
        %v1487 = vsel %vm341, %v1481, 0
        %v1490 = vsel %vm341, %v1482, 0
        %1492 = vmatprep.subr.bf16.mxu0 %v1490
        %1493 = vmatpush1.bf16.msra.mxu0 %v1487
        %1494 = vmatprep.subr.bf16.mxu0 0
        %1495 = vmatpush1.bf16.msra.mxu0 0
        %1496 = vmatprep.subr.bf16.mxu0 0
        %1497 = vmatpush1.bf16.msra.mxu0 0
        %1498 = vmatprep.subr.bf16.mxu0 0
        %1499 = vmatpush1.bf16.msra.mxu0 0
        %1500 = vmatprep.subr.bf16.mxu0 0
        %1501 = vmatpush1.bf16.msra.mxu0 0
        %1502 = vmatprep.subr.bf16.mxu0 0
        %1503 = vmatpush1.bf16.msra.mxu0 0
        %1504 = vmatprep.subr.bf16.mxu0 0
        %1505 = vmatpush1.bf16.msra.mxu0 0
        %1506 = vmatprep.subr.bf16.mxu0 0
        %1507 = vmatpush1.bf16.msra.mxu0 0
        %1508 = vmatprep.subr.bf16.mxu0 0
        %1509 = vmatpush1.bf16.msra.mxu0 0
        %1510 = vmatprep.subr.bf16.mxu0 0
        %1511 = vmatpush1.bf16.msra.mxu0 0
        %1512 = vmatprep.subr.bf16.mxu0 0
        %1513 = vmatpush1.bf16.msra.mxu0 0
        %1514 = vmatprep.subr.bf16.mxu0 0
        %1515 = vmatpush1.bf16.msra.mxu0 0
        %1516 = vmatprep.subr.bf16.mxu0 0
        %1517 = vmatpush1.bf16.msra.mxu0 0
        %1518 = vmatprep.subr.bf16.mxu0 0
        %1519 = vmatpush1.bf16.msra.mxu0 0
        %1520 = vmatprep.subr.bf16.mxu0 0
        %1521 = vmatpush1.bf16.msra.mxu0 0
        %1522 = vmatprep.subr.bf16.mxu0 0
        %1523 = vmatpush1.bf16.msra.mxu0 0
        %1524 = vmatprep.mubr.bf16.mxu0 0
        %1525 = vmatmul.mubr.bf16.gmra.mrb[0].mxu0 %v1484
        %v1526 = vpop.f32.mrb[0].mxu0
        %v1527 = vadd.f32 0.0, %v1526
        %v1528 = vpop.f32.mrb[0].mxu0
        %v1529 = vadd.f32 0.0, %v1528
        %v1530 = vpop.f32.mrb[0].mxu0
        %v1531 = vpop.f32.mrb[0].mxu0
        %1532 = vdwg.mxu0
        %v1533 = vsel %vm559, %v1527, 0.0
        %v1534 = vsel %vm560, %v1529, 0.0
        %v1535 = vadd.f32 %v1453, %v1533
        %v1536 = vadd.f32 %v1454, %v1534
        %v1537 = vld [vmem:[#allocation3 + $0x2] sm:$0x3f]
        %s1538 = scalar_lea.vmem %s3, 12
        %v1539 = vld [vmem:[%s1538] sm:$0x3]
        %v1541 = vcombine.high %v1537, %v1537
        %v1543 = vunpack.c.l.s4 1983009808
        %v1544 = vunpack.c.0.s8 %v1543
        %v1545 = vlaneseq
        %v1546 = vshrl.u32 %v1545, 7
        %v1547 = vsub.s32 %v1544, %v1546
        %v1548 = vrot.slane %v1537, %v1547
        %v1550 = vunpack.c.l.s4 1983009808
        %v1551 = vunpack.c.0.s8 %v1550
        %v1552 = vlaneseq
        %v1553 = vshrl.u32 %v1552, 7
        %v1554 = vsub.s32 %v1551, %v1553
        %v1555 = vrot.slane %v1541, %v1554
        %v1556 = vcombine.high %v1548, %v1548
        %1557 = vrot.lane.b32.xlu0 %v1548, 113
        %v1558 = vpop.permute.xlu0 %1557
        %1559 = vrot.lane.b32.xlu0 %v1556, 113
        %v1560 = vpop.permute.xlu0 %1559
        %1561 = vrot.lane.b32.xlu0 %v1555, 113
        %v1562 = vpop.permute.xlu0 %1561
        %v1563 = vsel %vm821, %v1558, %v1560
        %v1564 = vsel %vm821, %v1560, %v1562
        %v1566 = vsel %vm337, %v1539, 0
        %v1569 = vsel %vm341, %v1563, 0
        %v1572 = vsel %vm341, %v1564, 0
        %1574 = vmatprep.subr.bf16.mxu0 %v1572
        %1575 = vmatpush1.bf16.msra.mxu0 %v1569
        %1576 = vmatprep.subr.bf16.mxu0 0
        %1577 = vmatpush1.bf16.msra.mxu0 0
        %1578 = vmatprep.subr.bf16.mxu0 0
        %1579 = vmatpush1.bf16.msra.mxu0 0
        %1580 = vmatprep.subr.bf16.mxu0 0
        %1581 = vmatpush1.bf16.msra.mxu0 0
        %1582 = vmatprep.subr.bf16.mxu0 0
        %1583 = vmatpush1.bf16.msra.mxu0 0
        %1584 = vmatprep.subr.bf16.mxu0 0
        %1585 = vmatpush1.bf16.msra.mxu0 0
        %1586 = vmatprep.subr.bf16.mxu0 0
        %1587 = vmatpush1.bf16.msra.mxu0 0
        %1588 = vmatprep.subr.bf16.mxu0 0
        %1589 = vmatpush1.bf16.msra.mxu0 0
        %1590 = vmatprep.subr.bf16.mxu0 0
        %1591 = vmatpush1.bf16.msra.mxu0 0
        %1592 = vmatprep.subr.bf16.mxu0 0
        %1593 = vmatpush1.bf16.msra.mxu0 0
        %1594 = vmatprep.subr.bf16.mxu0 0
        %1595 = vmatpush1.bf16.msra.mxu0 0
        %1596 = vmatprep.subr.bf16.mxu0 0
        %1597 = vmatpush1.bf16.msra.mxu0 0
        %1598 = vmatprep.subr.bf16.mxu0 0
        %1599 = vmatpush1.bf16.msra.mxu0 0
        %1600 = vmatprep.subr.bf16.mxu0 0
        %1601 = vmatpush1.bf16.msra.mxu0 0
        %1602 = vmatprep.subr.bf16.mxu0 0
        %1603 = vmatpush1.bf16.msra.mxu0 0
        %1604 = vmatprep.subr.bf16.mxu0 0
        %1605 = vmatpush1.bf16.msra.mxu0 0
        %1606 = vmatprep.mubr.bf16.mxu0 0
        %1607 = vmatmul.mubr.bf16.gmra.mrb[0].mxu0 %v1566
        %v1608 = vpop.f32.mrb[0].mxu0
        %v1609 = vadd.f32 0.0, %v1608
        %v1610 = vpop.f32.mrb[0].mxu0
        %v1611 = vadd.f32 0.0, %v1610
        %v1612 = vpop.f32.mrb[0].mxu0
        %v1613 = vpop.f32.mrb[0].mxu0
        %1614 = vdwg.mxu0
        %v1615 = vsel %vm391, %v1609, 0.0
        %v1616 = vsel %vm392, %v1611, 0.0
        %v1617 = vadd.f32 %v1535, %v1615
        %v1618 = vadd.f32 %v1536, %v1616
        %v1619 = vld [vmem:[#allocation3 + $0x2] sm:$0x3f]
        %s1620 = scalar_lea.vmem %s3, 14
        %v1621 = vld [vmem:[%s1620] sm:$0x3]
        %v1623 = vcombine.high %v1619, %v1619
        %v1625 = vunpack.c.l.s4 1983009808
        %v1626 = vunpack.c.0.s8 %v1625
        %v1627 = vlaneseq
        %v1628 = vshrl.u32 %v1627, 7
        %v1629 = vsub.s32 %v1626, %v1628
        %v1630 = vrot.slane %v1619, %v1629
        %v1632 = vunpack.c.l.s4 1983009808
        %v1633 = vunpack.c.0.s8 %v1632
        %v1634 = vlaneseq
        %v1635 = vshrl.u32 %v1634, 7
        %v1636 = vsub.s32 %v1633, %v1635
        %v1637 = vrot.slane %v1623, %v1636
        %v1638 = vcombine.high %v1630, %v1630
        %1639 = vrot.lane.b32.xlu0 %v1630, 112
        %v1640 = vpop.permute.xlu0 %1639
        %1641 = vrot.lane.b32.xlu0 %v1638, 112
        %v1642 = vpop.permute.xlu0 %1641
        %1643 = vrot.lane.b32.xlu0 %v1637, 112
        %v1644 = vpop.permute.xlu0 %1643
        %v1645 = vsel %vm904, %v1640, %v1642
        %v1646 = vsel %vm904, %v1642, %v1644
        %v1648 = vsel %vm337, %v1621, 0
        %v1651 = vsel %vm341, %v1645, 0
        %v1654 = vsel %vm341, %v1646, 0
        %1656 = vmatprep.subr.bf16.mxu0 %v1654
        %1657 = vmatpush1.bf16.msra.mxu0 %v1651
        %1658 = vmatprep.subr.bf16.mxu0 0
        %1659 = vmatpush1.bf16.msra.mxu0 0
        %1660 = vmatprep.subr.bf16.mxu0 0
        %1661 = vmatpush1.bf16.msra.mxu0 0
        %1662 = vmatprep.subr.bf16.mxu0 0
        %1663 = vmatpush1.bf16.msra.mxu0 0
        %1664 = vmatprep.subr.bf16.mxu0 0
        %1665 = vmatpush1.bf16.msra.mxu0 0
        %1666 = vmatprep.subr.bf16.mxu0 0
        %1667 = vmatpush1.bf16.msra.mxu0 0
        %1668 = vmatprep.subr.bf16.mxu0 0
        %1669 = vmatpush1.bf16.msra.mxu0 0
        %1670 = vmatprep.subr.bf16.mxu0 0
        %1671 = vmatpush1.bf16.msra.mxu0 0
        %1672 = vmatprep.subr.bf16.mxu0 0
        %1673 = vmatpush1.bf16.msra.mxu0 0
        %1674 = vmatprep.subr.bf16.mxu0 0
        %1675 = vmatpush1.bf16.msra.mxu0 0
        %1676 = vmatprep.subr.bf16.mxu0 0
        %1677 = vmatpush1.bf16.msra.mxu0 0
        %1678 = vmatprep.subr.bf16.mxu0 0
        %1679 = vmatpush1.bf16.msra.mxu0 0
        %1680 = vmatprep.subr.bf16.mxu0 0
        %1681 = vmatpush1.bf16.msra.mxu0 0
        %1682 = vmatprep.subr.bf16.mxu0 0
        %1683 = vmatpush1.bf16.msra.mxu0 0
        %1684 = vmatprep.subr.bf16.mxu0 0
        %1685 = vmatpush1.bf16.msra.mxu0 0
        %1686 = vmatprep.subr.bf16.mxu0 0
        %1687 = vmatpush1.bf16.msra.mxu0 0
        %1688 = vmatprep.mubr.bf16.mxu0 0
        %1689 = vmatmul.mubr.bf16.gmra.mrb[0].mxu0 %v1648
        %v1690 = vpop.f32.mrb[0].mxu0
        %v1691 = vadd.f32 0.0, %v1690
        %v1692 = vpop.f32.mrb[0].mxu0
        %v1693 = vadd.f32 0.0, %v1692
        %v1694 = vpop.f32.mrb[0].mxu0
        %v1695 = vpop.f32.mrb[0].mxu0
        %1696 = vdwg.mxu0
        %v1697 = vadd.f32 %v1617, %v1691
        %v1698 = vadd.f32 %v1618, %v1693
        %v1699 = vld [vmem:[#allocation3 + $0x2] sm:$0x3f]
        %s1700 = scalar_lea.vmem %s3, 16
        %v1701 = vld [vmem:[%s1700] sm:$0x3]
        %v1703 = vcombine.high %v1699, %v1699
        %v1705 = vunpack.c.l.s4 1983009808
        %v1706 = vunpack.c.0.s8 %v1705
        %v1707 = vlaneseq
        %v1708 = vshrl.u32 %v1707, 7
        %v1709 = vsub.s32 %v1706, %v1708
        %v1710 = vrot.slane %v1699, %v1709
        %v1712 = vunpack.c.l.s4 1983009808
        %v1713 = vunpack.c.0.s8 %v1712
        %v1714 = vlaneseq
        %v1715 = vshrl.u32 %v1714, 7
        %v1716 = vsub.s32 %v1713, %v1715
        %v1717 = vrot.slane %v1703, %v1716
        %v1718 = vcombine.high %v1710, %v1710
        %1719 = vrot.lane.b32.xlu0 %v1710, 111
        %v1720 = vpop.permute.xlu0 %1719
        %1721 = vrot.lane.b32.xlu0 %v1718, 111
        %v1722 = vpop.permute.xlu0 %1721
        %1723 = vrot.lane.b32.xlu0 %v1717, 111
        %v1724 = vpop.permute.xlu0 %1723
        %v1725 = vsel %vm985, %v1720, %v1722
        %v1726 = vsel %vm985, %v1722, %v1724
        %v1728 = vsel %vm337, %v1701, 0
        %v1731 = vsel %vm341, %v1725, 0
        %v1734 = vsel %vm341, %v1726, 0
        %1736 = vmatprep.subr.bf16.mxu0 %v1734
        %1737 = vmatpush1.bf16.msra.mxu0 %v1731
        %1738 = vmatprep.subr.bf16.mxu0 0
        %1739 = vmatpush1.bf16.msra.mxu0 0
        %1740 = vmatprep.subr.bf16.mxu0 0
        %1741 = vmatpush1.bf16.msra.mxu0 0
        %1742 = vmatprep.subr.bf16.mxu0 0
        %1743 = vmatpush1.bf16.msra.mxu0 0
        %1744 = vmatprep.subr.bf16.mxu0 0
        %1745 = vmatpush1.bf16.msra.mxu0 0
        %1746 = vmatprep.subr.bf16.mxu0 0
        %1747 = vmatpush1.bf16.msra.mxu0 0
        %1748 = vmatprep.subr.bf16.mxu0 0
        %1749 = vmatpush1.bf16.msra.mxu0 0
        %1750 = vmatprep.subr.bf16.mxu0 0
        %1751 = vmatpush1.bf16.msra.mxu0 0
        %1752 = vmatprep.subr.bf16.mxu0 0
        %1753 = vmatpush1.bf16.msra.mxu0 0
        %1754 = vmatprep.subr.bf16.mxu0 0
        %1755 = vmatpush1.bf16.msra.mxu0 0
        %1756 = vmatprep.subr.bf16.mxu0 0
        %1757 = vmatpush1.bf16.msra.mxu0 0
        %1758 = vmatprep.subr.bf16.mxu0 0
        %1759 = vmatpush1.bf16.msra.mxu0 0
        %1760 = vmatprep.subr.bf16.mxu0 0
        %1761 = vmatpush1.bf16.msra.mxu0 0
        %1762 = vmatprep.subr.bf16.mxu0 0
        %1763 = vmatpush1.bf16.msra.mxu0 0
        %1764 = vmatprep.subr.bf16.mxu0 0
        %1765 = vmatpush1.bf16.msra.mxu0 0
        %1766 = vmatprep.subr.bf16.mxu0 0
        %1767 = vmatpush1.bf16.msra.mxu0 0
        %1768 = vmatprep.mubr.bf16.mxu0 0
        %1769 = vmatmul.mubr.bf16.gmra.mrb[0].mxu0 %v1728
        %v1770 = vpop.f32.mrb[0].mxu0
        %v1771 = vadd.f32 0.0, %v1770
        %v1772 = vpop.f32.mrb[0].mxu0
        %v1773 = vadd.f32 0.0, %v1772
        %v1774 = vpop.f32.mrb[0].mxu0
        %v1775 = vpop.f32.mrb[0].mxu0
        %1776 = vdwg.mxu0
        %v1777 = vsel %vm559, %v1771, 0.0
        %v1778 = vsel %vm560, %v1773, 0.0
        %v1779 = vadd.f32 %v1697, %v1777
        %v1780 = vadd.f32 %v1698, %v1778
        %v1781 = vld [vmem:[%s4] sm:$0xf]
        %1783 = vset.pattern.permute.xlu0 0
        %1784 = vperm.xlu0 %1783, %v1781
        %v1785 = vpop.permute.xlu0 %1784
        %v1787 = vadd.f32 %v1779, %v1785
        %v1788 = vadd.f32 %v1780, %v1785
        %v1789 = vld [vmem:[%s222] sm:$0xff]
        %v1792 = vcombine.low %v1787, %v1788
        %v1794 = vadd.f32 %v1789, %v1792
        %1795 = vst [vmem:[%s217] sm:$0xff] %v1794
        %s1796 = sand.u32 %s137, 1
        %s1797 = scalar_lea.sflag [#allocation5], %s1796
        %s1798 = sand.u32 %s137, 1
        %s1799 = smul.addr %s1798, 8
        %s1800 = scalar_lea.vmem [#allocation4], %s1799
        // Predicated region
        $region41: #{tpu_custom_call.1} parent=39 // pred_check
          %p1801 = pneg %p147
        $region42: #{tpu_custom_call.1} parent=39 // pred_check_branch
          %1803 = sbr.rel (%p1801) target = $region44
        $region43: #{tpu_custom_call.1} parent=39 // pred_region
          %s1805 = ssub.s32 128, 128
          %1806 = vsyncadd %s1797, %s1805
          %s1807 = smul.addr %s19, 2
          %s1808 = smul.addr %s1807, 64
          %s1809 = scalar_lea.hbm %s5, %s1808
          %s1811 = sshll.u32 %s1800, 4
          %s1812 = int_to_ptr.vmem [resolvable:$true] %s1811
          %1814 = dma.vmem_to_hbm [thread:$0]  %s1812, 128, %s1809, %s1797
        $region44: #{tpu_custom_call.1} parent=39 // pred_fallthru
          _
      $region40: #{tpu_custom_call.1} parent=5 // pred_fallthru
        _
      %p1815 = scmp.le.s32.totalorder 2, %s14
      // Predicated region
      $region45: #{tpu_custom_call.1} parent=5 // pred_check
        %p1816 = pneg %p1815
      $region46: #{tpu_custom_call.1} parent=5 // pred_check_branch
        %1818 = sbr.rel (%p1816) target = $region48
      $region47: #{tpu_custom_call.1} parent=5 // pred_region
        %s1819 = ssub.s32 %s14, 2
        // Predicated region
        $region49: #{tpu_custom_call.1} parent=47 // pred_check
          %p1820 = pneg %p153
        $region50: #{tpu_custom_call.1} parent=47 // pred_check_branch
          %1822 = sbr.rel (%p1820) target = $region52
        $region51: #{tpu_custom_call.1} parent=47 // pred_region
          %s1823 = sand.u32 %s138, 1
          %s1824 = scalar_lea.sflag [#allocation5], %s1823
          %s1825 = sand.u32 %s138, 1
          %s1826 = smul.addr %s1825, 8
          %s1827 = scalar_lea.vmem [#allocation4], %s1826
          %1828 = dma.done %s1824, 128
        $region52: #{tpu_custom_call.1} parent=47 // pred_fallthru
          _
      $region48: #{tpu_custom_call.1} parent=5 // pred_fallthru
        _
    $region6: #{tpu_custom_call.1} parent=1 // loop_footer
      %s18 = sadd.s32 1, %s14
    $region7: #{tpu_custom_call.1} parent=1 // loop_footer_branch
      %13 = sbr.rel target = $region3
    $region8: #{tpu_custom_call.1} parent=1 // loop_exit
      _
    %1829 = vsyncpa [#allocation5], 1
    %s1830 = scalar_lea.sflag [#allocation5], 1
    %1831 = vsyncpa %s1830, 1

</llo_original>
